<compile_context>
chip_gen: v6e
topology: v6e:2x2x1
jax: 0.10.0
libtpu: 0.0.40
codegen_flags: <defaults>
</compile_context>

<pallas_src>
import functools

import jax
import jax.numpy as jnp
from jax import lax
from jax.experimental import pallas as pl
from jax.experimental.pallas import tpu as pltpu


def _round_up(x, m):
    return (x + m - 1) // m * m


# Below this many output rows the MXU is <4% row-utilized and per-step grid
# overhead (~0.35 us) dominates: bypass Pallas (perf review item 2).
_MIN_PALLAS_M = 64

# Scoped VMEM budget: blocks used here are <1 MiB, 32 MiB is safe on every
# generation (v7x: 64 MiB physical, v5e/v6e: 128 MiB).
_VMEM_LIMIT = 32 * 1024 * 1024

# Double-buffered bf16 x/w whole-K blocks must fit under this to take the
# single-K-step path; otherwise fall back to the K-loop accumulator kernel.
_SINGLE_K_BYTES = 16 * 1024 * 1024


# ----------------------------------------------------------------------------
# Pallas kernels
# ----------------------------------------------------------------------------
def _epilogue(y, b_ref, r_ref, relu):
    y = y + b_ref[...]                       # BN bias (scale already in w)
    if r_ref is not None:
        y = y + r_ref[...].astype(jnp.float32)
    if relu:
        y = jnp.maximum(y, 0.0)
    return y


def _matmul_bias_kernel(x_ref, w_ref, b_ref, *rest, relu, has_residual):
    """Single-K-step: y = x @ w + bias [+ residual] [relu]."""
    if has_residual:
        r_ref, o_ref = rest
    else:
        r_ref = None
        (o_ref,) = rest
    y = jnp.dot(x_ref[...], w_ref[...], preferred_element_type=jnp.float32)
    o_ref[...] = _epilogue(y, b_ref, r_ref, relu).astype(o_ref.dtype)


def _matmul_bias_kloop_kernel(x_ref, w_ref, b_ref, *rest, relu, has_residual):
    """Fallback for very large K: K-axis accumulation into a VMEM scratch."""
    if has_residual:
        r_ref, o_ref, acc_ref = rest
    else:
        r_ref = None
        o_ref, acc_ref = rest

    k = pl.program_id(2)

    @pl.when(k == 0)
    def _():
        acc_ref[...] = jnp.zeros_like(acc_ref)

    acc_ref[...] += jnp.dot(x_ref[...], w_ref[...],
                            preferred_element_type=jnp.float32)

    @pl.when(k == pl.num_programs(2) - 1)
    def _():
        o_ref[...] = _epilogue(acc_ref[...], b_ref, r_ref, relu).astype(o_ref.dtype)


# ----------------------------------------------------------------------------
# matmul + bias [+ residual] [+ relu] wrapper
# ----------------------------------------------------------------------------
def matmul_bias(x, w, bias, n_actual, residual=None, *, relu=False,
                out_dtype=jnp.float32):
    """x: (M, Kp) bf16, w: (Kp, Np) bf16 (BN scale folded), bias: (1, Np) f32,
    residual: (M, n_actual) or None.  Returns (M, n_actual)."""
    M, Kp = x.shape
    Kp2, Np = w.shape
    assert Kp == Kp2 and Kp % 128 == 0 and Np % 128 == 0
    has_res = residual is not None

    # Tiny matmuls: plain jnp.dot, grid overhead would dominate (review item 2).
    if M < _MIN_PALLAS_M:
        y = jnp.dot(x, w, preferred_element_type=jnp.float32)[:, :n_actual]
        y = y + bias[:, :n_actual]
        if has_res:
            y = y + residual.astype(jnp.float32)
        if relu:
            y = jnp.maximum(y, 0.0)
        return y.astype(out_dtype)

    Mp = _round_up(M, 128)
    # tm=128 keeps >=2 i-blocks for v7x dual-TC whenever M >= 256; only go to
    # 256 for very large M (v6e headroom) where overhead is already amortized.
    tm = 256 if (Mp >= 1024 and Mp % 256 == 0) else 128
    tn = 128   # MXU-native on v5e, parallel-friendly on v7x
    grid_ij = (Mp // tm, Np // tn)

    xp = x if Mp == M else jnp.pad(x, ((0, Mp - M), (0, 0)))
    operands = [xp, w, bias]
    rp = None
    if has_res:
        rp = jnp.pad(residual.astype(jnp.bfloat16),
                     ((0, Mp - M), (0, Np - residual.shape[1])))

    single_k = 2 * 2 * Kp * (tm + tn) <= _SINGLE_K_BYTES  # dbl-buffered bf16 x+w

    if single_k:
        in_specs = [
            pl.BlockSpec((tm, Kp), lambda i, j: (i, 0)),
            pl.BlockSpec((Kp, tn), lambda i, j: (0, j)),
            pl.BlockSpec((1, tn), lambda i, j: (0, j)),
        ]
        if has_res:
            in_specs.append(pl.BlockSpec((tm, tn), lambda i, j: (i, j)))
            operands.append(rp)
        out = pl.pallas_call(
            functools.partial(_matmul_bias_kernel, relu=relu,
                              has_residual=has_res),
            out_shape=jax.ShapeDtypeStruct((Mp, Np), out_dtype),
            grid_spec=pltpu.PrefetchScalarGridSpec(
                num_scalar_prefetch=0,
                grid=grid_ij,
                in_specs=in_specs,
                out_specs=pl.BlockSpec((tm, tn), lambda i, j: (i, j)),
            ),
            compiler_params=pltpu.CompilerParams(
                dimension_semantics=("parallel", "parallel"),
                vmem_limit_bytes=_VMEM_LIMIT,
            ),
        )(*operands)
    else:
        # K too large to hold resident: chunked accumulation (not hit at these
        # problem sizes; kept for robustness).
        if Kp % 512 == 0:
            tk = 512
        elif Kp % 256 == 0:
            tk = 256
        else:
            tk = 128
        grid = (Mp // tm, Np // tn, Kp // tk)
        in_specs = [
            pl.BlockSpec((tm, tk), lambda i, j, k: (i, k)),
            pl.BlockSpec((tk, tn), lambda i, j, k: (k, j)),
            pl.BlockSpec((1, tn), lambda i, j, k: (0, j)),
        ]
        if has_res:
            in_specs.append(pl.BlockSpec((tm, tn), lambda i, j, k: (i, j)))
            operands.append(rp)
        out = pl.pallas_call(
            functools.partial(_matmul_bias_kloop_kernel, relu=relu,
                              has_residual=has_res),
            out_shape=jax.ShapeDtypeStruct((Mp, Np), out_dtype),
            grid_spec=pltpu.PrefetchScalarGridSpec(
                num_scalar_prefetch=0,
                grid=grid,
                in_specs=in_specs,
                out_specs=pl.BlockSpec((tm, tn), lambda i, j, k: (i, j)),
                scratch_shapes=[pltpu.VMEM((tm, tn), jnp.float32)],
            ),
            compiler_params=pltpu.CompilerParams(
                dimension_semantics=("parallel", "parallel", "arbitrary"),
                vmem_limit_bytes=_VMEM_LIMIT,
            ),
        )(*operands)

    return out[:M, :n_actual]


# ----------------------------------------------------------------------------
# Conv / pool / block glue (im2col in plain JAX, matmul+epilogue in Pallas)
# ----------------------------------------------------------------------------
def conv2d_bn(x_nhwc, w_mat, bias, *, kh, kw, cout, stride, pad, relu,
              residual=None, out_dtype=jnp.bfloat16):
    """w_mat: (Kp, Np) bf16, BN scale folded. Conv + BN bias (+res) (+ReLU)."""
    N, H, W, cin = x_nhwc.shape
    K = kh * kw * cin
    Kp, Np = w_mat.shape
    OH = (H + 2 * pad - kh) // stride + 1
    OW = (W + 2 * pad - kw) // stride + 1
    M = N * OH * OW

    xb = x_nhwc.astype(jnp.bfloat16)
    if pad:
        xb = jnp.pad(xb, ((0, 0), (pad, pad), (pad, pad), (0, 0)))
    cols = []
    for i in range(kh):
        for j in range(kw):
            cols.append(
                xb[:, i:i + stride * OH:stride, j:j + stride * OW:stride, :])
    if Kp > K:  # emit the K padding inside the same concatenate (no extra copy)
        cols.append(jnp.zeros((N, OH, OW, Kp - K), jnp.bfloat16))
    patches = jnp.concatenate(cols, axis=-1).reshape(M, Kp)

    res_flat = None
    if residual is not None:
        res_flat = residual.reshape(M, cout)

    out = matmul_bias(patches, w_mat, bias, cout, res_flat, relu=relu,
                      out_dtype=out_dtype)
    return out.reshape(N, OH, OW, cout)


def maxpool2d_3x3_s2(x_nhwc):
    """MaxPool2d(kernel_size=3, stride=2, padding=1) on an NHWC tensor."""
    init = jnp.array(-jnp.inf, dtype=x_nhwc.dtype)
    return lax.reduce_window(
        x_nhwc, init, lax.max,
        window_dimensions=(1, 3, 3, 1),
        window_strides=(1, 2, 2, 1),
        padding=((0, 0), (1, 1), (1, 1), (0, 0)))


_STAGE_CFG = ((64, 1), (128, 2), (256, 2), (512, 2))   # (cout, stride) layer1..4


def resnet_encoder_forward(x_nchw, fp):
    x = jnp.transpose(x_nchw, (0, 2, 3, 1))            # NCHW -> NHWC
    # stem: conv 7x7 s2 p3 -> bn -> relu -> maxpool 3x3 s2 p1
    x = conv2d_bn(x, fp['conv1']['w'], fp['conv1']['b'], kh=7, kw=7, cout=64,
                  stride=2, pad=3, relu=True)
    x = maxpool2d_3x3_s2(x)
    # 4 stages of 2 BasicBlocks each (resnet18)
    for (cout, stage_stride), stage in zip(_STAGE_CFG, fp['stages']):
        for b, blk in enumerate(stage):
            s = stage_stride if b == 0 else 1
            out = conv2d_bn(x, blk['conv1']['w'], blk['conv1']['b'],
                            kh=3, kw=3, cout=cout, stride=s, pad=1, relu=True)
            if 'down' in blk:
                identity = conv2d_bn(x, blk['down']['w'], blk['down']['b'],
                                     kh=1, kw=1, cout=cout, stride=s, pad=0,
                                     relu=False)
            else:
                identity = x
            # out = relu(bn2(conv2(out)) + identity)
            x = conv2d_bn(out, blk['conv2']['w'], blk['conv2']['b'],
                          kh=3, kw=3, cout=cout, stride=1, pad=1, relu=True,
                          residual=identity)
    # adaptive avg pool to 1x1 + flatten (tiny NxC reduction; plain-JAX glue)
    N, H, W, C = x.shape
    feat = jnp.mean(x.reshape(N, H * W, C).astype(jnp.float32), axis=1)
    # g: Linear(512, feature_dim) — tiny (M = batch), bypass Pallas per review.
    return feat @ fp['g_w'] + fp['g_b']


# ----------------------------------------------------------------------------
# Parameter prep: fold BN scale into weights, cast/pad once (review item 3)
# ----------------------------------------------------------------------------
def _prep_conv(w, scale, bias):
    """w: (KH, KW, Cin, Cout) f32 -> (Kp, Np) bf16 with BN scale folded; bias
    -> (1, Np) f32."""
    kh, kw, cin, cout = w.shape
    K = kh * kw * cin
    Kp = _round_up(K, 128)
    Np = _round_up(cout, 128)
    wm = (w.reshape(K, cout) * scale[None, :].astype(jnp.float32))
    wm = jnp.pad(wm.astype(jnp.bfloat16), ((0, Kp - K), (0, Np - cout)))
    b = jnp.pad(bias.astype(jnp.float32), (0, Np - cout)).reshape(1, Np)
    return {'w': wm, 'b': b}


def prepare_params(p):
    fp = {'conv1': _prep_conv(p['conv1_w'], p['bn1_scale'], p['bn1_bias'])}
    stages = []
    for stage in p['stages']:
        blocks = []
        for blk in stage:
            fb = {'conv1': _prep_conv(blk['conv1_w'], blk['bn1_scale'],
                                      blk['bn1_bias']),
                  'conv2': _prep_conv(blk['conv2_w'], blk['bn2_scale'],
                                      blk['bn2_bias'])}
            if 'down_w' in blk:
                fb['down'] = _prep_conv(blk['down_w'], blk['down_scale'],
                                        blk['down_bias'])
            blocks.append(fb)
        stages.append(blocks)
    fp['stages'] = stages
    fp['g_w'] = p['g_w']
    fp['g_b'] = p['g_b']
    return fp


# ----------------------------------------------------------------------------
# Deterministic parameter init (synthetic weights; no checkpoint loading)
# ----------------------------------------------------------------------------
def _he(key, shape, fan_in):
    return (jax.random.normal(key, shape, jnp.float32)
            * jnp.sqrt(2.0 / fan_in)).astype(jnp.float32)


def _bn_fold(key, c, eps=1e-5):
    k1, k2, k3, k4 = jax.random.split(key, 4)
    gamma = 1.0 + 0.1 * jax.random.normal(k1, (c,), jnp.float32)
    beta = 0.1 * jax.random.normal(k2, (c,), jnp.float32)
    mean = 0.1 * jax.random.normal(k3, (c,), jnp.float32)
    var = 1.0 + 0.1 * jax.random.uniform(k4, (c,), jnp.float32)
    scale = gamma / jnp.sqrt(var + eps)
    bias = beta - mean * scale
    return scale, bias


def init_params(key, feature_dim=128):
    keys = iter(jax.random.split(key, 128))
    params = {}
    params['conv1_w'] = _he(next(keys), (7, 7, 3, 64), 7 * 7 * 3)
    params['bn1_scale'], params['bn1_bias'] = _bn_fold(next(keys), 64)

    stage_cfg = [(64, 64, 1), (64, 128, 2), (128, 256, 2), (256, 512, 2)]
    stages = []
    for cin, cout, stride in stage_cfg:
        blocks = []
        for b in range(2):
            s = stride if b == 0 else 1
            ci = cin if b == 0 else cout
            blk = {}
            blk['conv1_w'] = _he(next(keys), (3, 3, ci, cout), 3 * 3 * ci)
            blk['bn1_scale'], blk['bn1_bias'] = _bn_fold(next(keys), cout)
            blk['conv2_w'] = _he(next(keys), (3, 3, cout, cout), 3 * 3 * cout)
            blk['bn2_scale'], blk['bn2_bias'] = _bn_fold(next(keys), cout)
            if b == 0 and (s != 1 or ci != cout):
                blk['down_w'] = _he(next(keys), (1, 1, ci, cout), ci)
                blk['down_scale'], blk['down_bias'] = _bn_fold(next(keys), cout)
            blocks.append(blk)
        stages.append(blocks)
    params['stages'] = stages

    params['g_w'] = _he(next(keys), (512, feature_dim), 512)  # featdim=512
    params['g_b'] = 0.01 * jax.random.normal(next(keys), (feature_dim,),
                                             jnp.float32)
    return params


if __name__ == "__main__":
    key = jax.random.PRNGKey(0)
    pkey, xkey = jax.random.split(key)
    raw_params = init_params(pkey, feature_dim=128)
    fparams = prepare_params(raw_params)   # fold BN scale / cast / pad ONCE

    # NCHW input, as in the PyTorch module. 32x32 spatial -> 1x1 after layer4.
    x = jax.random.normal(xkey, (2, 3, 32, 32), jnp.float32)

    forward = jax.jit(resnet_encoder_forward)
    feat = jax.block_until_ready(forward(x, fparams))

    assert feat.shape == (2, 128), feat.shape
    assert bool(jnp.all(jnp.isfinite(feat)))
    print("KERNEL_OK")
</pallas_src>

<mosaic_0001>
module attributes {stable_mosaic.version = 11 : i64} {
  func.func @_matmul_bias_kernel(%arg0: i32, %arg1: i32, %arg2: memref<128x256xbf16, #tpu.memory_space<vmem>>, %arg3: memref<256x128xbf16, #tpu.memory_space<vmem>>, %arg4: memref<1x128xf32, #tpu.memory_space<vmem>>, %arg5: memref<128x128xbf16, #tpu.memory_space<vmem>>) attributes {dimension_semantics = [#tpu.dimension_semantics<parallel>, #tpu.dimension_semantics<parallel>], iteration_bounds = array<i64: 4, 1>, scalar_prefetch = 0 : i64, scratch_operands = 0 : i64, tpu.core_type = #tpu.core_type<tc>, window_params = [{transform_indices = @transform_0, window_bounds = array<i64: 128, 256>}, {transform_indices = @transform_1, window_bounds = array<i64: 256, 128>}, {transform_indices = @transform_2, window_bounds = array<i64: 1, 128>}, {transform_indices = @transform_3, window_bounds = array<i64: 128, 128>}]} {
    %c0 = arith.constant 0 : index
    %c0_0 = arith.constant 0 : index
    %0 = vector.load %arg2[%c0, %c0_0] : memref<128x256xbf16, #tpu.memory_space<vmem>>, vector<128x256xbf16>
    %c0_1 = arith.constant 0 : index
    %c0_2 = arith.constant 0 : index
    %1 = vector.load %arg3[%c0_1, %c0_2] : memref<256x128xbf16, #tpu.memory_space<vmem>>, vector<256x128xbf16>
    %cst = arith.constant dense<0.000000e+00> : vector<128x128xf32>
    %2 = tpu.matmul %0, %1, %cst {dimension_numbers = #tpu.dot_dimension_numbers<[1], [0], [0], [1], [0, 0, 1, 1], [], []>} : vector<128x256xbf16>, vector<256x128xbf16>, vector<128x128xf32> -> vector<128x128xf32>
    %c0_3 = arith.constant 0 : index
    %c0_4 = arith.constant 0 : index
    %3 = vector.load %arg4[%c0_3, %c0_4] : memref<1x128xf32, #tpu.memory_space<vmem>>, vector<1x128xf32>
    %4 = vector.broadcast %3 : vector<1x128xf32> to vector<128x128xf32>
    %5 = arith.addf %2, %4 : vector<128x128xf32>
    %cst_5 = arith.constant 0.000000e+00 : f32
    %6 = vector.broadcast %cst_5 : f32 to vector<128x128xf32>
    %7 = arith.maximumf %5, %6 : vector<128x128xf32>
    %8 = arith.truncf %7 : vector<128x128xf32> to vector<128x128xbf16>
    %c0_6 = arith.constant 0 : index
    %c0_7 = arith.constant 0 : index
    %9 = vector.load %arg5[%c0_6, %c0_7] : memref<128x128xbf16, #tpu.memory_space<vmem>>, vector<128x128xbf16>
    tpu.vector_store %arg5[%c0_6, %c0_7], %8 {strides = array<i32>} : memref<128x128xbf16, #tpu.memory_space<vmem>>, vector<128x128xbf16>,
    return
  }
  func.func @transform_0(%arg0: i32, %arg1: i32) -> (i32, i32) {
    %c0_i32 = arith.constant 0 : i32
    %c0_i32_0 = arith.constant 0 : i32
    return %arg0, %c0_i32 : i32, i32
  }
  func.func @transform_1(%arg0: i32, %arg1: i32) -> (i32, i32) {
    %c0_i32 = arith.constant 0 : i32
    %c0_i32_0 = arith.constant 0 : i32
    return %c0_i32, %arg1 : i32, i32
  }
  func.func @transform_2(%arg0: i32, %arg1: i32) -> (i32, i32) {
    %c0_i32 = arith.constant 0 : i32
    %c0_i32_0 = arith.constant 0 : i32
    return %c0_i32, %arg1 : i32, i32
  }
  func.func @transform_3(%arg0: i32, %arg1: i32) -> (i32, i32) {
    %c0_i32 = arith.constant 0 : i32
    return %arg0, %arg1 : i32, i32
  }
}

module attributes {stable_mosaic.version = 11 : i64} {
  func.func @_matmul_bias_kernel(%arg0: i32, %arg1: i32, %arg2: memref<128x640xbf16, #tpu.memory_space<vmem>>, %arg3: memref<640x128xbf16, #tpu.memory_space<vmem>>, %arg4: memref<1x128xf32, #tpu.memory_space<vmem>>, %arg5: memref<128x128xbf16, #tpu.memory_space<vmem>>) attributes {dimension_semantics = [#tpu.dimension_semantics<parallel>, #tpu.dimension_semantics<parallel>], iteration_bounds = array<i64: 1, 1>, scalar_prefetch = 0 : i64, scratch_operands = 0 : i64, tpu.core_type = #tpu.core_type<tc>, window_params = [{transform_indices = @transform_0, window_bounds = array<i64: 128, 640>}, {transform_indices = @transform_1, window_bounds = array<i64: 640, 128>}, {transform_indices = @transform_2, window_bounds = array<i64: 1, 128>}, {transform_indices = @transform_3, window_bounds = array<i64: 128, 128>}]} {
    %c0 = arith.constant 0 : index
    %c0_0 = arith.constant 0 : index
    %0 = vector.load %arg2[%c0, %c0_0] : memref<128x640xbf16, #tpu.memory_space<vmem>>, vector<128x640xbf16>
    %c0_1 = arith.constant 0 : index
    %c0_2 = arith.constant 0 : index
    %1 = vector.load %arg3[%c0_1, %c0_2] : memref<640x128xbf16, #tpu.memory_space<vmem>>, vector<640x128xbf16>
    %cst = arith.constant dense<0.000000e+00> : vector<128x128xf32>
    %2 = tpu.matmul %0, %1, %cst {dimension_numbers = #tpu.dot_dimension_numbers<[1], [0], [0], [1], [0, 0, 1, 1], [], []>} : vector<128x640xbf16>, vector<640x128xbf16>, vector<128x128xf32> -> vector<128x128xf32>
    %c0_3 = arith.constant 0 : index
    %c0_4 = arith.constant 0 : index
    %3 = vector.load %arg4[%c0_3, %c0_4] : memref<1x128xf32, #tpu.memory_space<vmem>>, vector<1x128xf32>
    %4 = vector.broadcast %3 : vector<1x128xf32> to vector<128x128xf32>
    %5 = arith.addf %2, %4 : vector<128x128xf32>
    %cst_5 = arith.constant 0.000000e+00 : f32
    %6 = vector.broadcast %cst_5 : f32 to vector<128x128xf32>
    %7 = arith.maximumf %5, %6 : vector<128x128xf32>
    %8 = arith.truncf %7 : vector<128x128xf32> to vector<128x128xbf16>
    %c0_6 = arith.constant 0 : index
    %c0_7 = arith.constant 0 : index
    %9 = vector.load %arg5[%c0_6, %c0_7] : memref<128x128xbf16, #tpu.memory_space<vmem>>, vector<128x128xbf16>
    tpu.vector_store %arg5[%c0_6, %c0_7], %8 {strides = array<i32>} : memref<128x128xbf16, #tpu.memory_space<vmem>>, vector<128x128xbf16>,
    return
  }
  func.func @transform_0(%arg0: i32, %arg1: i32) -> (i32, i32) {
    %c0_i32 = arith.constant 0 : i32
    %c0_i32_0 = arith.constant 0 : i32
    return %arg0, %c0_i32 : i32, i32
  }
  func.func @transform_1(%arg0: i32, %arg1: i32) -> (i32, i32) {
    %c0_i32 = arith.constant 0 : i32
    %c0_i32_0 = arith.constant 0 : i32
    return %c0_i32, %arg1 : i32, i32
  }
  func.func @transform_2(%arg0: i32, %arg1: i32) -> (i32, i32) {
    %c0_i32 = arith.constant 0 : i32
    %c0_i32_0 = arith.constant 0 : i32
    return %c0_i32, %arg1 : i32, i32
  }
  func.func @transform_3(%arg0: i32, %arg1: i32) -> (i32, i32) {
    %c0_i32 = arith.constant 0 : i32
    return %arg0, %arg1 : i32, i32
  }
}

module attributes {stable_mosaic.version = 11 : i64} {
  func.func @_matmul_bias_kernel(%arg0: i32, %arg1: i32, %arg2: memref<128x640xbf16, #tpu.memory_space<vmem>>, %arg3: memref<640x128xbf16, #tpu.memory_space<vmem>>, %arg4: memref<1x128xf32, #tpu.memory_space<vmem>>, %arg5: memref<128x128xbf16, #tpu.memory_space<vmem>>, %arg6: memref<128x128xbf16, #tpu.memory_space<vmem>>) attributes {dimension_semantics = [#tpu.dimension_semantics<parallel>, #tpu.dimension_semantics<parallel>], iteration_bounds = array<i64: 1, 1>, scalar_prefetch = 0 : i64, scratch_operands = 0 : i64, tpu.core_type = #tpu.core_type<tc>, window_params = [{transform_indices = @transform_0, window_bounds = array<i64: 128, 640>}, {transform_indices = @transform_1, window_bounds = array<i64: 640, 128>}, {transform_indices = @transform_2, window_bounds = array<i64: 1, 128>}, {transform_indices = @transform_3, window_bounds = array<i64: 128, 128>}, {transform_indices = @transform_4, window_bounds = array<i64: 128, 128>}]} {
    %c0 = arith.constant 0 : index
    %c0_0 = arith.constant 0 : index
    %0 = vector.load %arg2[%c0, %c0_0] : memref<128x640xbf16, #tpu.memory_space<vmem>>, vector<128x640xbf16>
    %c0_1 = arith.constant 0 : index
    %c0_2 = arith.constant 0 : index
    %1 = vector.load %arg3[%c0_1, %c0_2] : memref<640x128xbf16, #tpu.memory_space<vmem>>, vector<640x128xbf16>
    %cst = arith.constant dense<0.000000e+00> : vector<128x128xf32>
    %2 = tpu.matmul %0, %1, %cst {dimension_numbers = #tpu.dot_dimension_numbers<[1], [0], [0], [1], [0, 0, 1, 1], [], []>} : vector<128x640xbf16>, vector<640x128xbf16>, vector<128x128xf32> -> vector<128x128xf32>
    %c0_3 = arith.constant 0 : index
    %c0_4 = arith.constant 0 : index
    %3 = vector.load %arg4[%c0_3, %c0_4] : memref<1x128xf32, #tpu.memory_space<vmem>>, vector<1x128xf32>
    %4 = vector.broadcast %3 : vector<1x128xf32> to vector<128x128xf32>
    %5 = arith.addf %2, %4 : vector<128x128xf32>
    %c0_5 = arith.constant 0 : index
    %c0_6 = arith.constant 0 : index
    %6 = vector.load %arg5[%c0_5, %c0_6] : memref<128x128xbf16, #tpu.memory_space<vmem>>, vector<128x128xbf16>
    %7 = arith.extf %6 : vector<128x128xbf16> to vector<128x128xf32>
    %8 = arith.addf %5, %7 : vector<128x128xf32>
    %cst_7 = arith.constant 0.000000e+00 : f32
    %9 = vector.broadcast %cst_7 : f32 to vector<128x128xf32>
    %10 = arith.maximumf %8, %9 : vector<128x128xf32>
    %11 = arith.truncf %10 : vector<128x128xf32> to vector<128x128xbf16>
    %c0_8 = arith.constant 0 : index
    %c0_9 = arith.constant 0 : index
    %12 = vector.load %arg6[%c0_8, %c0_9] : memref<128x128xbf16, #tpu.memory_space<vmem>>, vector<128x128xbf16>
    tpu.vector_store %arg6[%c0_8, %c0_9], %11 {strides = array<i32>} : memref<128x128xbf16, #tpu.memory_space<vmem>>, vector<128x128xbf16>,
    return
  }
  func.func @transform_0(%arg0: i32, %arg1: i32) -> (i32, i32) {
    %c0_i32 = arith.constant 0 : i32
    %c0_i32_0 = arith.constant 0 : i32
    return %arg0, %c0_i32 : i32, i32
  }
  func.func @transform_1(%arg0: i32, %arg1: i32) -> (i32, i32) {
    %c0_i32 = arith.constant 0 : i32
    %c0_i32_0 = arith.constant 0 : i32
    return %c0_i32, %arg1 : i32, i32
  }
  func.func @transform_2(%arg0: i32, %arg1: i32) -> (i32, i32) {
    %c0_i32 = arith.constant 0 : i32
    %c0_i32_0 = arith.constant 0 : i32
    return %c0_i32, %arg1 : i32, i32
  }
  func.func @transform_3(%arg0: i32, %arg1: i32) -> (i32, i32) {
    %c0_i32 = arith.constant 0 : i32
    return %arg0, %arg1 : i32, i32
  }
  func.func @transform_4(%arg0: i32, %arg1: i32) -> (i32, i32) {
    %c0_i32 = arith.constant 0 : i32
    return %arg0, %arg1 : i32, i32
  }
}

</mosaic_0001>

<llo_original>
// kernel: resnet_encoder_forward.5
$region0: #{resnet_encoder_forward.5}
  #allocation0 [shape = 'u32[]', space=smem, size = 0x4, offset = 0x4, fixed_abs, tag = 'smem constant byte address 0x4 - core index']
  #allocation1 [shape = 'u32[144,128]{1,0:T(1,128)}', space=vmem, size = 0x12000, scoped, tag = 'internal scratch']
  %s0 = inlined_call_operand.vmem [shape: bf16[512,256], index: 0, kind: input, shape index: {}]
  %s1 = inlined_call_operand.vmem [shape: bf16[256,128], index: 1, kind: input, shape index: {}]
  %s2 = inlined_call_operand.vmem [shape: f32[1,128], index: 2, kind: input, shape index: {}]
  %s3 = inlined_call_operand.vmem [shape: bf16[512,128], index: 3, kind: output, shape index: {}]
  %s4 = sld [smem:[#allocation0]]
  $region45: #{resnet_encoder_forward.5} parent=0
    _
  %s6 = ssub.s32 1, %s4
  %s7 = scalar_select 0, %s6, %s4
  loop: start=0, step=1, limit=6
  $region2: #{resnet_encoder_forward.5} parent=0 // loop_pre_header
    _
  $region3: #{resnet_encoder_forward.5} parent=0 // loop_header
    %s9 = sphi 0, %s13
    %p10 = scmp.ge.s32.totalorder %s9, 6
    %s16 = sphi 0, %s28
    %s17 = sphi 0, %s24
    %s18 = sphi 0, %s16
    %s19 = sphi 0, %s17
    %s20 = sphi 0, %s18
    %s21 = sphi 0, %s19
    %s31 = sphi 0, %s33
    %s34 = sphi 0, %s31
    %s35 = sphi 0, %s34
    %s51 = sphi 0, %s35
    %s57 = sphi 0, %s59
    %s60 = sphi 0, %s57
    %s61 = sphi 0, %s60
    %s77 = sphi 0, %s61
    %s83 = sphi 0, %s85
    %s86 = sphi 0, %s83
    %s87 = sphi 0, %s86
    %s103 = sphi 0, %s87
    %s111 = sphi 0, %s113
    %s114 = sphi 0, %s111
    %s115 = sphi 0, %s114
    %s131 = sphi 0, %s115
  $region4: #{resnet_encoder_forward.5} parent=0 // loop_header_branch
    %12 = sbr.rel (%p10) target = $region8
  $region5: #{resnet_encoder_forward.5} parent=0 // loop_body
    %s14 = ssub.s32 %s9, 1
    %s15 = ssub.s32 %s9, 2
    %s22 = sadd.s32 1, %s17
    %p23 = scmp.ge.s32.totalorder %s22, 1
    %s24 = scalar_select %p23, 0, %s22
    %s25 = sadd.s32 1, %s16
    %s26 = scalar_select %p23, %s25, %s16
    %p27 = scmp.ge.s32.totalorder %s26, 4
    %s28 = scalar_select %p27, 0, %s26
    %s29 = ssub.s32 %s16, %s28
    %p30 = scmp.eq.s32.totalorder %s29, 0
    %s32 = sadd.s32 %s31, 1
    %s33 = scalar_select %p30, %s31, %s32
    %p36 = pneg %p30
    %p37 = scmp.eq.s32.totalorder %s9, 3
    %p38 = por %p36, %p37
    %p39 = scmp.ne.s32.totalorder %s31, %s34
    %p40 = scmp.eq.s32.totalorder %s9, 0
    %p41 = por %p39, %p40
    %p42 = scmp.ne.s32.totalorder %s31, %s34
    %p43 = scmp.eq.s32.totalorder %s14, 3
    %p44 = por %p42, %p43
    %p45 = scmp.ne.s32.totalorder %s34, %s35
    %p46 = scmp.eq.s32.totalorder %s14, 0
    %p47 = por %p45, %p46
    %p48 = scmp.ne.s32.totalorder %s34, %s35
    %p49 = scmp.eq.s32.totalorder %s15, 3
    %p50 = por %p48, %p49
    %p52 = scmp.ne.s32.totalorder %s35, %s51
    %p53 = scmp.eq.s32.totalorder %s15, 0
    %p54 = por %p52, %p53
    %s55 = ssub.s32 %s17, %s24
    %p56 = scmp.eq.s32.totalorder %s55, 0
    %s58 = sadd.s32 %s57, 1
    %s59 = scalar_select %p56, %s57, %s58
    %p62 = pneg %p56
    %p63 = scmp.eq.s32.totalorder %s9, 3
    %p64 = por %p62, %p63
    %p65 = scmp.ne.s32.totalorder %s57, %s60
    %p66 = scmp.eq.s32.totalorder %s9, 0
    %p67 = por %p65, %p66
    %p68 = scmp.ne.s32.totalorder %s57, %s60
    %p69 = scmp.eq.s32.totalorder %s14, 3
    %p70 = por %p68, %p69
    %p71 = scmp.ne.s32.totalorder %s60, %s61
    %p72 = scmp.eq.s32.totalorder %s14, 0
    %p73 = por %p71, %p72
    %p74 = scmp.ne.s32.totalorder %s60, %s61
    %p75 = scmp.eq.s32.totalorder %s15, 3
    %p76 = por %p74, %p75
    %p78 = scmp.ne.s32.totalorder %s61, %s77
    %p79 = scmp.eq.s32.totalorder %s15, 0
    %p80 = por %p78, %p79
    %s81 = ssub.s32 %s17, %s24
    %p82 = scmp.eq.s32.totalorder %s81, 0
    %s84 = sadd.s32 %s83, 1
    %s85 = scalar_select %p82, %s83, %s84
    %p88 = pneg %p82
    %p89 = scmp.eq.s32.totalorder %s9, 3
    %p90 = por %p88, %p89
    %p91 = scmp.ne.s32.totalorder %s83, %s86
    %p92 = scmp.eq.s32.totalorder %s9, 0
    %p93 = por %p91, %p92
    %p94 = scmp.ne.s32.totalorder %s83, %s86
    %p95 = scmp.eq.s32.totalorder %s14, 3
    %p96 = por %p94, %p95
    %p97 = scmp.ne.s32.totalorder %s86, %s87
    %p98 = scmp.eq.s32.totalorder %s14, 0
    %p99 = por %p97, %p98
    %p100 = scmp.ne.s32.totalorder %s86, %s87
    %p101 = scmp.eq.s32.totalorder %s15, 3
    %p102 = por %p100, %p101
    %p104 = scmp.ne.s32.totalorder %s87, %s103
    %p105 = scmp.eq.s32.totalorder %s15, 0
    %p106 = por %p104, %p105
    %s107 = ssub.s32 %s16, %s28
    %s108 = ssub.s32 %s17, %s24
    %s109 = sor.u32 %s107, %s108
    %p110 = scmp.eq.s32.totalorder %s109, 0
    %s112 = sadd.s32 %s111, 1
    %s113 = scalar_select %p110, %s111, %s112
    %p116 = pneg %p110
    %p117 = scmp.eq.s32.totalorder %s9, 3
    %p118 = por %p116, %p117
    %p119 = scmp.ne.s32.totalorder %s111, %s114
    %p120 = scmp.eq.s32.totalorder %s9, 0
    %p121 = por %p119, %p120
    %p122 = scmp.ne.s32.totalorder %s111, %s114
    %p123 = scmp.eq.s32.totalorder %s14, 3
    %p124 = por %p122, %p123
    %p125 = scmp.ne.s32.totalorder %s114, %s115
    %p126 = scmp.eq.s32.totalorder %s14, 0
    %p127 = por %p125, %p126
    %p128 = scmp.ne.s32.totalorder %s114, %s115
    %p129 = scmp.eq.s32.totalorder %s15, 3
    %p130 = por %p128, %p129
    %p132 = scmp.ne.s32.totalorder %s115, %s131
    %p133 = scmp.eq.s32.totalorder %s15, 0
    %p134 = por %p132, %p133
    %p135 = scmp.le.s32.totalorder 1, %s9
    %p136 = scmp.lt.s32.totalorder %s9, 5
    %p137 = pnand %p135, %p136
    %p138 = pneg %p137
    // Predicated region
    $region9: #{resnet_encoder_forward.5} parent=5 // pred_check
      _
    $region10: #{resnet_encoder_forward.5} parent=5 // pred_check_branch
      %140 = sbr.rel (%p137) target = $region12
    $region11: #{resnet_encoder_forward.5} parent=5 // pred_region
      %s141 = ssub.s32 %s9, 1
      // Predicated region
      $region13: #{resnet_encoder_forward.5} parent=11 // pred_check
        %p142 = pneg %p73
      $region14: #{resnet_encoder_forward.5} parent=11 // pred_check_branch
        %144 = sbr.rel (%p142) target = $region16
      $region15: #{resnet_encoder_forward.5} parent=11 // pred_region
        %p145 = scmp.lt.s32.totalorder %s19, 0
        %s146 = scalar_select %p145, %s19, 0
        %s147 = smul.addr %s146, 4
        %s148 = scalar_lea.vmem %s1, %s147
      $region16: #{resnet_encoder_forward.5} parent=11 // pred_fallthru
        _
      // Predicated region
      $region17: #{resnet_encoder_forward.5} parent=11 // pred_check
        %p149 = pneg %p99
      $region18: #{resnet_encoder_forward.5} parent=11 // pred_check_branch
        %151 = sbr.rel (%p149) target = $region20
      $region19: #{resnet_encoder_forward.5} parent=11 // pred_region
        %p152 = scmp.lt.s32.totalorder %s19, 0
        %s153 = scalar_select %p152, %s19, 0
        %s154 = scalar_lea.vmem %s2, %s153
      $region20: #{resnet_encoder_forward.5} parent=11 // pred_fallthru
        _
    $region12: #{resnet_encoder_forward.5} parent=5 // pred_fallthru
      _
    %p155 = scmp.lt.s32.totalorder %s9, 4
    // Predicated region
    $region21: #{resnet_encoder_forward.5} parent=5 // pred_check
      %p156 = pneg %p155
    $region22: #{resnet_encoder_forward.5} parent=5 // pred_check_branch
      %158 = sbr.rel (%p156) target = $region24
    $region23: #{resnet_encoder_forward.5} parent=5 // pred_region
      // Predicated region
      $region25: #{resnet_encoder_forward.5} parent=23 // pred_check
        %p159 = pneg %p41
      $region26: #{resnet_encoder_forward.5} parent=23 // pred_check_branch
        %161 = sbr.rel (%p159) target = $region28
      $region27: #{resnet_encoder_forward.5} parent=23 // pred_region
        %s162 = smul.u32 16, %s16
        %p163 = scmp.lt.s32.totalorder %s162, 63
        %s164 = scalar_select %p163, %s162, 63
        %s165 = smul.addr %s164, 2
        %s166 = smul.addr %s165, 4
        %s167 = scalar_lea.vmem %s0, %s166
        %s168 = smul.u32 16, %s16
      $region28: #{resnet_encoder_forward.5} parent=23 // pred_fallthru
        _
    $region24: #{resnet_encoder_forward.5} parent=5 // pred_fallthru
      _
    %p169 = scmp.le.s32.totalorder 1, %s9
    %p170 = scmp.lt.s32.totalorder %s9, 5
    %p171 = pnand %p169, %p170
    %p172 = pneg %p171
    // Predicated region
    $region29: #{resnet_encoder_forward.5} parent=5 // pred_check
      _
    $region30: #{resnet_encoder_forward.5} parent=5 // pred_check_branch
      %174 = sbr.rel (%p171) target = $region32
    $region31: #{resnet_encoder_forward.5} parent=5 // pred_region
      %s175 = ssub.s32 %s9, 1
      %s176 = smul.u32 16, %s18
      %p177 = scmp.lt.s32.totalorder %s176, 63
      %s178 = scalar_select %p177, %s176, 63
      %s179 = smul.addr %s178, 2
      %s180 = smul.addr %s179, 4
      %s181 = scalar_lea.vmem %s0, %s180
      %p182 = pneg %p47
      %p183 = pneg %p44
      %p184 = scmp.lt.s32.totalorder %s19, 0
      %s185 = scalar_select %p184, %s19, 0
      %s186 = smul.addr %s185, 4
      %s187 = scalar_lea.vmem %s1, %s186
      %p188 = pneg %p73
      %p189 = pneg %p70
      %p190 = scmp.lt.s32.totalorder %s19, 0
      %s191 = scalar_select %p190, %s19, 0
      %s192 = scalar_lea.vmem %s2, %s191
      %p193 = pneg %p99
      %p194 = pneg %p96
      %p195 = pneg %p127
      %p196 = pneg %p124
      %s197 = smul.u32 16, %s18
      %p198 = scmp.lt.s32.totalorder %s197, 63
      %s199 = scalar_select %p198, %s197, 63
      %p200 = scmp.lt.s32.totalorder %s19, 0
      %s201 = scalar_select %p200, %s19, 0
      %s202 = sadd.s32 %s201, %s199
      %s203 = smul.addr %s202, 4
      %s204 = scalar_lea.vmem %s3, %s203
      %s205 = smul.u32 16, %s18
      %p206 = scmp.lt.s32.totalorder %s205, 63
      %s207 = scalar_select %p206, %s205, 63
      %s208 = smul.addr %s207, 2
      %s209 = smul.addr %s208, 4
      %s210 = scalar_lea.vmem %s0, %s209
      %s211 = smul.u32 16, %s18
      %p212 = scmp.lt.s32.totalorder %s19, 0
      %s213 = scalar_select %p212, %s19, 0
      %s214 = smul.addr %s213, 4
      %s215 = scalar_lea.vmem %s1, %s214
      %p216 = scmp.lt.s32.totalorder %s19, 0
      %s217 = scalar_select %p216, %s19, 0
      %s218 = scalar_lea.vmem %s2, %s217
      %s219 = smul.u32 16, %s18
      %p220 = scmp.lt.s32.totalorder %s219, 63
      %s221 = scalar_select %p220, %s219, 63
      %p222 = scmp.lt.s32.totalorder %s19, 0
      %s223 = scalar_select %p222, %s19, 0
      %s224 = sadd.s32 %s223, %s221
      %s225 = smul.addr %s224, 4
      %s226 = scalar_lea.vmem %s3, %s225
      %s227 = smul.u32 16, %s18
      %v229 = vld [vmem:[%s210] sm:$0xff]
      %v230 = vld [vmem:[%s210 + $0x8] sm:$0xff]
      %v231 = vld [vmem:[%s210 + $0x10] sm:$0xff]
      %v232 = vld [vmem:[%s210 + $0x18] sm:$0xff]
      %v233 = vld [vmem:[%s210 + $0x20] sm:$0xff]
      %v234 = vld [vmem:[%s210 + $0x28] sm:$0xff]
      %v235 = vld [vmem:[%s210 + $0x30] sm:$0xff]
      %v236 = vld [vmem:[%s210 + $0x38] sm:$0xff]
      %v237 = vld [vmem:[%s210 + $0x40] sm:$0xff]
      %v238 = vld [vmem:[%s210 + $0x48] sm:$0xff]
      %v239 = vld [vmem:[%s210 + $0x50] sm:$0xff]
      %v240 = vld [vmem:[%s210 + $0x58] sm:$0xff]
      %v241 = vld [vmem:[%s210 + $0x60] sm:$0xff]
      %v242 = vld [vmem:[%s210 + $0x68] sm:$0xff]
      %v243 = vld [vmem:[%s210 + $0x70] sm:$0xff]
      %v244 = vld [vmem:[%s210 + $0x78] sm:$0xff]
      %v245 = vld [vmem:[%s215] sm:$0xf]
      %v246 = vld [vmem:[%s215 + $0x4] sm:$0xf]
      %v247 = vld [vmem:[%s215 + $0x8] sm:$0xf]
      %v248 = vld [vmem:[%s215 + $0xc] sm:$0xf]
      %v249 = vld [vmem:[%s215 + $0x10] sm:$0xf]
      %v250 = vld [vmem:[%s215 + $0x14] sm:$0xf]
      %v251 = vld [vmem:[%s215 + $0x18] sm:$0xf]
      %v252 = vld [vmem:[%s215 + $0x1c] sm:$0xf]
      %v253 = vld [vmem:[%s215 + $0x20] sm:$0xf]
      %v254 = vld [vmem:[%s215 + $0x24] sm:$0xf]
      %v255 = vld [vmem:[%s215 + $0x28] sm:$0xf]
      %v256 = vld [vmem:[%s215 + $0x2c] sm:$0xf]
      %v257 = vld [vmem:[%s215 + $0x30] sm:$0xf]
      %v258 = vld [vmem:[%s215 + $0x34] sm:$0xf]
      %v259 = vld [vmem:[%s215 + $0x38] sm:$0xf]
      %v260 = vld [vmem:[%s215 + $0x3c] sm:$0xf]
      %v261 = vld [vmem:[%s215 + $0x40] sm:$0xf]
      %v262 = vld [vmem:[%s215 + $0x44] sm:$0xf]
      %v263 = vld [vmem:[%s215 + $0x48] sm:$0xf]
      %v264 = vld [vmem:[%s215 + $0x4c] sm:$0xf]
      %v265 = vld [vmem:[%s215 + $0x50] sm:$0xf]
      %v266 = vld [vmem:[%s215 + $0x54] sm:$0xf]
      %v267 = vld [vmem:[%s215 + $0x58] sm:$0xf]
      %v268 = vld [vmem:[%s215 + $0x5c] sm:$0xf]
      %v269 = vld [vmem:[%s215 + $0x60] sm:$0xf]
      %v270 = vld [vmem:[%s215 + $0x64] sm:$0xf]
      %v271 = vld [vmem:[%s215 + $0x68] sm:$0xf]
      %v272 = vld [vmem:[%s215 + $0x6c] sm:$0xf]
      %v273 = vld [vmem:[%s215 + $0x70] sm:$0xf]
      %v274 = vld [vmem:[%s215 + $0x74] sm:$0xf]
      %v275 = vld [vmem:[%s215 + $0x78] sm:$0xf]
      %v276 = vld [vmem:[%s215 + $0x7c] sm:$0xf]
      %v277 = vld [vmem:[%s218] sm:$0x1]
      %v279 = vlaneseq
      %v280 = vshrl.u32 %v279, 7
      %v281 = vsub.s32 0, %v280
      %v282 = vrot.slane %v277, %v281
      %v300 = vunpack.c.l.b16 %v229
      %v301 = vunpack.c.h.b16 %v229
      %v302 = vunpack.c.l.b16 %v230
      %v303 = vunpack.c.h.b16 %v230
      %v304 = vunpack.c.l.b16 %v231
      %v305 = vunpack.c.h.b16 %v231
      %v306 = vunpack.c.l.b16 %v232
      %v307 = vunpack.c.h.b16 %v232
      %v308 = vunpack.c.l.b16 %v233
      %v309 = vunpack.c.h.b16 %v233
      %v310 = vunpack.c.l.b16 %v234
      %v311 = vunpack.c.h.b16 %v234
      %v312 = vunpack.c.l.b16 %v235
      %v313 = vunpack.c.h.b16 %v235
      %v314 = vunpack.c.l.b16 %v236
      %v315 = vunpack.c.h.b16 %v236
      %v316 = vunpack.c.l.b16 %v237
      %v317 = vunpack.c.h.b16 %v237
      %v318 = vunpack.c.l.b16 %v238
      %v319 = vunpack.c.h.b16 %v238
      %v320 = vunpack.c.l.b16 %v239
      %v321 = vunpack.c.h.b16 %v239
      %v322 = vunpack.c.l.b16 %v240
      %v323 = vunpack.c.h.b16 %v240
      %v324 = vunpack.c.l.b16 %v241
      %v325 = vunpack.c.h.b16 %v241
      %v326 = vunpack.c.l.b16 %v242
      %v327 = vunpack.c.h.b16 %v242
      %v328 = vunpack.c.l.b16 %v243
      %v329 = vunpack.c.h.b16 %v243
      %v330 = vunpack.c.l.b16 %v244
      %v331 = vunpack.c.h.b16 %v244
      %v332 = vpack.c.b16 %v302, %v300
      %v333 = vpack.c.b16 %v303, %v301
      %v334 = vpack.c.b16 %v306, %v304
      %v335 = vpack.c.b16 %v307, %v305
      %v336 = vpack.c.b16 %v310, %v308
      %v337 = vpack.c.b16 %v311, %v309
      %v338 = vpack.c.b16 %v314, %v312
      %v339 = vpack.c.b16 %v315, %v313
      %v340 = vpack.c.b16 %v318, %v316
      %v341 = vpack.c.b16 %v319, %v317
      %v342 = vpack.c.b16 %v322, %v320
      %v343 = vpack.c.b16 %v323, %v321
      %v344 = vpack.c.b16 %v326, %v324
      %v345 = vpack.c.b16 %v327, %v325
      %v346 = vpack.c.b16 %v330, %v328
      %v347 = vpack.c.b16 %v331, %v329
      %v396 = vunpack.c.l.b16 %v245
      %v397 = vunpack.c.l.b16 %v246
      %v398 = vunpack.c.l.b16 %v247
      %v399 = vunpack.c.l.b16 %v248
      %v400 = vunpack.c.l.b16 %v249
      %v401 = vunpack.c.l.b16 %v250
      %v402 = vunpack.c.l.b16 %v251
      %v403 = vunpack.c.l.b16 %v252
      %v404 = vunpack.c.l.b16 %v253
      %v405 = vunpack.c.l.b16 %v254
      %v406 = vunpack.c.l.b16 %v255
      %v407 = vunpack.c.l.b16 %v256
      %v408 = vunpack.c.l.b16 %v257
      %v409 = vunpack.c.l.b16 %v258
      %v410 = vunpack.c.l.b16 %v259
      %v411 = vunpack.c.l.b16 %v260
      %v412 = vunpack.c.l.b16 %v261
      %v413 = vunpack.c.l.b16 %v262
      %v414 = vunpack.c.l.b16 %v263
      %v415 = vunpack.c.l.b16 %v264
      %v416 = vunpack.c.l.b16 %v265
      %v417 = vunpack.c.l.b16 %v266
      %v418 = vunpack.c.l.b16 %v267
      %v419 = vunpack.c.l.b16 %v268
      %v420 = vunpack.c.l.b16 %v269
      %v421 = vunpack.c.l.b16 %v270
      %v422 = vunpack.c.l.b16 %v271
      %v423 = vunpack.c.l.b16 %v272
      %v424 = vunpack.c.l.b16 %v273
      %v425 = vunpack.c.l.b16 %v274
      %v426 = vunpack.c.l.b16 %v275
      %v427 = vunpack.c.l.b16 %v276
      %v428 = vpack.c.b16 %v397, %v396
      %v429 = vpack.c.b16 %v399, %v398
      %v430 = vpack.c.b16 %v401, %v400
      %v431 = vpack.c.b16 %v403, %v402
      %v432 = vpack.c.b16 %v405, %v404
      %v433 = vpack.c.b16 %v407, %v406
      %v434 = vpack.c.b16 %v409, %v408
      %v435 = vpack.c.b16 %v411, %v410
      %v436 = vpack.c.b16 %v413, %v412
      %v437 = vpack.c.b16 %v415, %v414
      %v438 = vpack.c.b16 %v417, %v416
      %v439 = vpack.c.b16 %v419, %v418
      %v440 = vpack.c.b16 %v421, %v420
      %v441 = vpack.c.b16 %v423, %v422
      %v442 = vpack.c.b16 %v425, %v424
      %v443 = vpack.c.b16 %v427, %v426
      %460 = vmatprep.subr.bf16.mxu0 0
      %461 = vmatpush1.bf16.msra.mxu0 %v435
      %462 = vmatprep.subr.bf16.mxu0 0
      %463 = vmatpush1.bf16.msra.mxu0 %v434
      %464 = vmatprep.subr.bf16.mxu0 0
      %465 = vmatpush1.bf16.msra.mxu0 %v433
      %466 = vmatprep.subr.bf16.mxu0 0
      %467 = vmatpush1.bf16.msra.mxu0 %v432
      %468 = vmatprep.subr.bf16.mxu0 0
      %469 = vmatpush1.bf16.msra.mxu0 %v431
      %470 = vmatprep.subr.bf16.mxu0 0
      %471 = vmatpush1.bf16.msra.mxu0 %v430
      %472 = vmatprep.subr.bf16.mxu0 0
      %473 = vmatpush1.bf16.msra.mxu0 %v429
      %474 = vmatprep.subr.bf16.mxu0 0
      %475 = vmatpush1.bf16.msra.mxu0 %v428
      %476 = vmatprep.subr.bf16.mxu0 0
      %477 = vmatpush2.bf16.msra.mxu0 %v443
      %478 = vmatprep.subr.bf16.mxu0 0
      %479 = vmatpush2.bf16.msra.mxu0 %v442
      %480 = vmatprep.subr.bf16.mxu0 0
      %481 = vmatpush2.bf16.msra.mxu0 %v441
      %482 = vmatprep.subr.bf16.mxu0 0
      %483 = vmatpush2.bf16.msra.mxu0 %v440
      %484 = vmatprep.subr.bf16.mxu0 0
      %485 = vmatpush2.bf16.msra.mxu0 %v439
      %486 = vmatprep.subr.bf16.mxu0 0
      %487 = vmatpush2.bf16.msra.mxu0 %v438
      %488 = vmatprep.subr.bf16.mxu0 0
      %489 = vmatpush2.bf16.msra.mxu0 %v437
      %490 = vmatprep.subr.bf16.mxu0 0
      %491 = vmatpush2.bf16.msra.mxu0 %v436
      %492 = vmatprep.mubr.bf16.mxu0 %v333
      %493 = vmatmul.mubr.bf16.gmra.mxu0 %v332
      %v494 = vpop.f32.mrf.mxu0
      %v495 = vadd.f32 %v282, %v494
      %v496 = vpop.f32.mrf.mxu0
      %v497 = vpop.f32.mrf.mxu0
      %v498 = vadd.f32 %v282, %v497
      %v499 = vpop.f32.mrf.mxu0
      %500 = vmatprep.mubr.bf16.mxu0 %v335
      %501 = vmatmul.mubr.bf16.gmra.mxu0 %v334
      %v502 = vpop.f32.mrf.mxu0
      %v503 = vadd.f32 %v282, %v502
      %v504 = vpop.f32.mrf.mxu0
      %v505 = vpop.f32.mrf.mxu0
      %v506 = vadd.f32 %v282, %v505
      %v507 = vpop.f32.mrf.mxu0
      %508 = vmatprep.mubr.bf16.mxu0 %v337
      %509 = vmatmul.mubr.bf16.gmra.mxu0 %v336
      %v510 = vpop.f32.mrf.mxu0
      %v511 = vadd.f32 %v282, %v510
      %v512 = vpop.f32.mrf.mxu0
      %v513 = vpop.f32.mrf.mxu0
      %v514 = vadd.f32 %v282, %v513
      %v515 = vpop.f32.mrf.mxu0
      %516 = vmatprep.mubr.bf16.mxu0 %v339
      %517 = vmatmul.mubr.bf16.gmra.mxu0 %v338
      %v518 = vpop.f32.mrf.mxu0
      %v519 = vadd.f32 %v282, %v518
      %v520 = vpop.f32.mrf.mxu0
      %v521 = vpop.f32.mrf.mxu0
      %v522 = vadd.f32 %v282, %v521
      %v523 = vpop.f32.mrf.mxu0
      %524 = vmatprep.mubr.bf16.mxu0 %v341
      %525 = vmatmul.mubr.bf16.gmra.mxu0 %v340
      %v526 = vpop.f32.mrf.mxu0
      %v527 = vadd.f32 %v282, %v526
      %v528 = vpop.f32.mrf.mxu0
      %v529 = vpop.f32.mrf.mxu0
      %v530 = vadd.f32 %v282, %v529
      %v531 = vpop.f32.mrf.mxu0
      %532 = vmatprep.mubr.bf16.mxu0 %v343
      %533 = vmatmul.mubr.bf16.gmra.mxu0 %v342
      %v534 = vpop.f32.mrf.mxu0
      %v535 = vadd.f32 %v282, %v534
      %v536 = vpop.f32.mrf.mxu0
      %v537 = vpop.f32.mrf.mxu0
      %v538 = vadd.f32 %v282, %v537
      %v539 = vpop.f32.mrf.mxu0
      %540 = vmatprep.mubr.bf16.mxu0 %v345
      %541 = vmatmul.mubr.bf16.gmra.mxu0 %v344
      %v542 = vpop.f32.mrf.mxu0
      %v543 = vadd.f32 %v282, %v542
      %v544 = vpop.f32.mrf.mxu0
      %v545 = vpop.f32.mrf.mxu0
      %v546 = vadd.f32 %v282, %v545
      %v547 = vpop.f32.mrf.mxu0
      %548 = vmatprep.mubr.bf16.mxu0 %v347
      %549 = vmatmul.mubr.bf16.gmra.mxu0 %v346
      %v550 = vpop.f32.mrf.mxu0
      %v551 = vadd.f32 %v282, %v550
      %v552 = vpop.f32.mrf.mxu0
      %v553 = vpop.f32.mrf.mxu0
      %v554 = vadd.f32 %v282, %v553
      %v555 = vpop.f32.mrf.mxu0
      %556 = vdwg.mxu0
      %v557 = vmax.f32 %v495, 0.0
      %v558 = vmax.f32 %v498, 0.0
      %v559 = vmax.f32 %v503, 0.0
      %v560 = vmax.f32 %v506, 0.0
      %v561 = vmax.f32 %v511, 0.0
      %v562 = vmax.f32 %v514, 0.0
      %v563 = vmax.f32 %v519, 0.0
      %v564 = vmax.f32 %v522, 0.0
      %v565 = vmax.f32 %v527, 0.0
      %v566 = vmax.f32 %v530, 0.0
      %v567 = vmax.f32 %v535, 0.0
      %v568 = vmax.f32 %v538, 0.0
      %v569 = vmax.f32 %v543, 0.0
      %v570 = vmax.f32 %v546, 0.0
      %v571 = vmax.f32 %v551, 0.0
      %v572 = vmax.f32 %v554, 0.0
      %v573 = vpack.c.bf16 %v558, %v557
      %v574 = vpack.c.bf16 %v560, %v559
      %v575 = vpack.c.bf16 %v562, %v561
      %v576 = vpack.c.bf16 %v564, %v563
      %v577 = vpack.c.bf16 %v566, %v565
      %v578 = vpack.c.bf16 %v568, %v567
      %v579 = vpack.c.bf16 %v570, %v569
      %v580 = vpack.c.bf16 %v572, %v571
      %v589 = vunpack.c.l.b16 %v573
      %v590 = vunpack.c.h.b16 %v573
      %v591 = vunpack.c.l.b16 %v574
      %v592 = vunpack.c.h.b16 %v574
      %v593 = vunpack.c.l.b16 %v575
      %v594 = vunpack.c.h.b16 %v575
      %v595 = vunpack.c.l.b16 %v576
      %v596 = vunpack.c.h.b16 %v576
      %v597 = vunpack.c.l.b16 %v577
      %v598 = vunpack.c.h.b16 %v577
      %v599 = vunpack.c.l.b16 %v578
      %v600 = vunpack.c.h.b16 %v578
      %v601 = vunpack.c.l.b16 %v579
      %v602 = vunpack.c.h.b16 %v579
      %v603 = vunpack.c.l.b16 %v580
      %v604 = vunpack.c.h.b16 %v580
      %v605 = vpack.c.b16 %v589, %v589
      %v606 = vpack.c.b16 %v590, %v590
      %v607 = vpack.c.b16 %v591, %v591
      %v608 = vpack.c.b16 %v592, %v592
      %v609 = vpack.c.b16 %v593, %v593
      %v610 = vpack.c.b16 %v594, %v594
      %v611 = vpack.c.b16 %v595, %v595
      %v612 = vpack.c.b16 %v596, %v596
      %v613 = vpack.c.b16 %v597, %v597
      %v614 = vpack.c.b16 %v598, %v598
      %v615 = vpack.c.b16 %v599, %v599
      %v616 = vpack.c.b16 %v600, %v600
      %v617 = vpack.c.b16 %v601, %v601
      %v618 = vpack.c.b16 %v602, %v602
      %v619 = vpack.c.b16 %v603, %v603
      %v620 = vpack.c.b16 %v604, %v604
      %637 = vst [vmem:[%s226] sm:$0xf] %v605
      %638 = vst [vmem:[%s226 + $0x4] sm:$0xf] %v606
      %639 = vst [vmem:[%s226 + $0x8] sm:$0xf] %v607
      %640 = vst [vmem:[%s226 + $0xc] sm:$0xf] %v608
      %641 = vst [vmem:[%s226 + $0x10] sm:$0xf] %v609
      %642 = vst [vmem:[%s226 + $0x14] sm:$0xf] %v610
      %643 = vst [vmem:[%s226 + $0x18] sm:$0xf] %v611
      %644 = vst [vmem:[%s226 + $0x1c] sm:$0xf] %v612
      %645 = vst [vmem:[%s226 + $0x20] sm:$0xf] %v613
      %646 = vst [vmem:[%s226 + $0x24] sm:$0xf] %v614
      %647 = vst [vmem:[%s226 + $0x28] sm:$0xf] %v615
      %648 = vst [vmem:[%s226 + $0x2c] sm:$0xf] %v616
      %649 = vst [vmem:[%s226 + $0x30] sm:$0xf] %v617
      %650 = vst [vmem:[%s226 + $0x34] sm:$0xf] %v618
      %651 = vst [vmem:[%s226 + $0x38] sm:$0xf] %v619
      %652 = vst [vmem:[%s226 + $0x3c] sm:$0xf] %v620
      %s653 = smul.u32 16, %s18
      %p654 = scmp.lt.s32.totalorder %s653, 63
      %s655 = scalar_select %p654, %s653, 63
      %p656 = scmp.lt.s32.totalorder %s19, 0
      %s657 = scalar_select %p656, %s19, 0
      %s658 = sadd.s32 %s657, %s655
      %s659 = smul.addr %s658, 4
      %s660 = scalar_lea.vmem %s3, %s659
      // Predicated region
      $region33: #{resnet_encoder_forward.5} parent=31 // pred_check
        %p661 = pneg %p124
      $region34: #{resnet_encoder_forward.5} parent=31 // pred_check_branch
        %663 = sbr.rel (%p661) target = $region36
      $region35: #{resnet_encoder_forward.5} parent=31 // pred_region
        %s664 = smul.u32 16, %s18
      $region36: #{resnet_encoder_forward.5} parent=31 // pred_fallthru
        _
    $region32: #{resnet_encoder_forward.5} parent=5 // pred_fallthru
      _
    %p665 = scmp.le.s32.totalorder 2, %s9
    // Predicated region
    $region37: #{resnet_encoder_forward.5} parent=5 // pred_check
      %p666 = pneg %p665
    $region38: #{resnet_encoder_forward.5} parent=5 // pred_check_branch
      %668 = sbr.rel (%p666) target = $region40
    $region39: #{resnet_encoder_forward.5} parent=5 // pred_region
      %s669 = ssub.s32 %s9, 2
      // Predicated region
      $region41: #{resnet_encoder_forward.5} parent=39 // pred_check
        %p670 = pneg %p130
      $region42: #{resnet_encoder_forward.5} parent=39 // pred_check_branch
        %672 = sbr.rel (%p670) target = $region44
      $region43: #{resnet_encoder_forward.5} parent=39 // pred_region
        %s673 = smul.u32 16, %s20
        %p674 = scmp.lt.s32.totalorder %s673, 63
        %s675 = scalar_select %p674, %s673, 63
        %p676 = scmp.lt.s32.totalorder %s21, 0
        %s677 = scalar_select %p676, %s21, 0
        %s678 = sadd.s32 %s677, %s675
        %s679 = smul.addr %s678, 4
        %s680 = scalar_lea.vmem %s3, %s679
      $region44: #{resnet_encoder_forward.5} parent=39 // pred_fallthru
        _
    $region40: #{resnet_encoder_forward.5} parent=5 // pred_fallthru
      _
  $region6: #{resnet_encoder_forward.5} parent=0 // loop_footer
    %s13 = sadd.s32 1, %s9
  $region7: #{resnet_encoder_forward.5} parent=0 // loop_footer_branch
    %8 = sbr.rel target = $region3
  $region8: #{resnet_encoder_forward.5} parent=0 // loop_exit
    _

// kernel: resnet_encoder_forward.6
$region0: #{resnet_encoder_forward.6}
  #allocation0 [shape = 'u32[]', space=smem, size = 0x4, offset = 0x4, fixed_abs, tag = 'smem constant byte address 0x4 - core index']
  #allocation1 [shape = 'u32[144,128]{1,0:T(1,128)}', space=vmem, size = 0x12000, scoped, tag = 'internal scratch']
  %s0 = inlined_call_operand.vmem [shape: bf16[128,640], index: 0, kind: input, shape index: {}]
  %s1 = inlined_call_operand.vmem [shape: bf16[640,128], index: 1, kind: input, shape index: {}]
  %s2 = inlined_call_operand.vmem [shape: f32[1,128], index: 2, kind: input, shape index: {}]
  %s3 = inlined_call_operand.vmem [shape: bf16[128,128], index: 3, kind: output, shape index: {}]
  %s4 = sld [smem:[#allocation0]]
  $region22: #{resnet_encoder_forward.6} parent=0
    _
  %s6 = ssub.s32 1, %s4
  %s7 = scalar_select 0, %s6, %s4
  // Predicated region
  $region2: #{resnet_encoder_forward.6} parent=0 // pred_check
    _
  $region3: #{resnet_encoder_forward.6} parent=0 // pred_check_branch
    %9 = sbr.rel (0) target = $region5
  $region4: #{resnet_encoder_forward.6} parent=0 // pred_region
    _
  $region5: #{resnet_encoder_forward.6} parent=0 // pred_fallthru
    _
  // Predicated region
  $region6: #{resnet_encoder_forward.6} parent=0 // pred_check
    _
  $region7: #{resnet_encoder_forward.6} parent=0 // pred_check_branch
    %11 = sbr.rel (0) target = $region9
  $region8: #{resnet_encoder_forward.6} parent=0 // pred_region
    _
  $region9: #{resnet_encoder_forward.6} parent=0 // pred_fallthru
    _
  // Predicated region
  $region10: #{resnet_encoder_forward.6} parent=0 // pred_check
    _
  $region11: #{resnet_encoder_forward.6} parent=0 // pred_check_branch
    %13 = sbr.rel (0) target = $region13
  $region12: #{resnet_encoder_forward.6} parent=0 // pred_region
    _
  $region13: #{resnet_encoder_forward.6} parent=0 // pred_fallthru
    _
  %v15 = vld [vmem:[%s0] sm:$0xff]
  %v16 = vld [vmem:[%s0 + $0x8] sm:$0xff]
  %v17 = vld [vmem:[%s0 + $0x10] sm:$0xf]
  %v18 = vld [vmem:[%s0 + $0x14] sm:$0xff]
  %v19 = vld [vmem:[%s0 + $0x1c] sm:$0xff]
  %v20 = vld [vmem:[%s0 + $0x24] sm:$0xf]
  %v21 = vld [vmem:[%s0 + $0x28] sm:$0xff]
  %v22 = vld [vmem:[%s0 + $0x30] sm:$0xff]
  %v23 = vld [vmem:[%s0 + $0x38] sm:$0xf]
  %v24 = vld [vmem:[%s0 + $0x3c] sm:$0xff]
  %v25 = vld [vmem:[%s0 + $0x44] sm:$0xff]
  %v26 = vld [vmem:[%s0 + $0x4c] sm:$0xf]
  %v27 = vld [vmem:[%s0 + $0x50] sm:$0xff]
  %v28 = vld [vmem:[%s0 + $0x58] sm:$0xff]
  %v29 = vld [vmem:[%s0 + $0x60] sm:$0xf]
  %v30 = vld [vmem:[%s0 + $0x64] sm:$0xff]
  %v31 = vld [vmem:[%s0 + $0x6c] sm:$0xff]
  %v32 = vld [vmem:[%s0 + $0x74] sm:$0xf]
  %v33 = vld [vmem:[%s0 + $0x78] sm:$0xff]
  %v34 = vld [vmem:[%s0 + $0x80] sm:$0xff]
  %v35 = vld [vmem:[%s0 + $0x88] sm:$0xf]
  %v36 = vld [vmem:[%s0 + $0x8c] sm:$0xff]
  %v37 = vld [vmem:[%s0 + $0x94] sm:$0xff]
  %v38 = vld [vmem:[%s0 + $0x9c] sm:$0xf]
  %v39 = vld [vmem:[%s0 + $0xa0] sm:$0xff]
  %v40 = vld [vmem:[%s0 + $0xa8] sm:$0xff]
  %v41 = vld [vmem:[%s0 + $0xb0] sm:$0xf]
  %v42 = vld [vmem:[%s0 + $0xb4] sm:$0xff]
  %v43 = vld [vmem:[%s0 + $0xbc] sm:$0xff]
  %v44 = vld [vmem:[%s0 + $0xc4] sm:$0xf]
  %v45 = vld [vmem:[%s0 + $0xc8] sm:$0xff]
  %v46 = vld [vmem:[%s0 + $0xd0] sm:$0xff]
  %v47 = vld [vmem:[%s0 + $0xd8] sm:$0xf]
  %v48 = vld [vmem:[%s0 + $0xdc] sm:$0xff]
  %v49 = vld [vmem:[%s0 + $0xe4] sm:$0xff]
  %v50 = vld [vmem:[%s0 + $0xec] sm:$0xf]
  %v51 = vld [vmem:[%s0 + $0xf0] sm:$0xff]
  %v52 = vld [vmem:[%s0 + $0xf8] sm:$0xff]
  %v53 = vld [vmem:[%s0 + $0x100] sm:$0xf]
  %v54 = vld [vmem:[%s0 + $0x104] sm:$0xff]
  %v55 = vld [vmem:[%s0 + $0x10c] sm:$0xff]
  %v56 = vld [vmem:[%s0 + $0x114] sm:$0xf]
  %v57 = vld [vmem:[%s0 + $0x118] sm:$0xff]
  %v58 = vld [vmem:[%s0 + $0x120] sm:$0xff]
  %v59 = vld [vmem:[%s0 + $0x128] sm:$0xf]
  %v60 = vld [vmem:[%s0 + $0x12c] sm:$0xff]
  %v61 = vld [vmem:[%s0 + $0x134] sm:$0xff]
  %v62 = vld [vmem:[%s0 + $0x13c] sm:$0xf]
  %v63 = vld [vmem:[%s1] sm:$0xf]
  %v64 = vld [vmem:[%s1 + $0x4] sm:$0xf]
  %v65 = vld [vmem:[%s1 + $0x8] sm:$0xf]
  %v66 = vld [vmem:[%s1 + $0xc] sm:$0xf]
  %v67 = vld [vmem:[%s1 + $0x10] sm:$0xf]
  %v68 = vld [vmem:[%s1 + $0x14] sm:$0xf]
  %v69 = vld [vmem:[%s1 + $0x18] sm:$0xf]
  %v70 = vld [vmem:[%s1 + $0x1c] sm:$0xf]
  %v71 = vld [vmem:[%s1 + $0x20] sm:$0xf]
  %v72 = vld [vmem:[%s1 + $0x24] sm:$0xf]
  %v73 = vld [vmem:[%s1 + $0x28] sm:$0xf]
  %v74 = vld [vmem:[%s1 + $0x2c] sm:$0xf]
  %v75 = vld [vmem:[%s1 + $0x30] sm:$0xf]
  %v76 = vld [vmem:[%s1 + $0x34] sm:$0xf]
  %v77 = vld [vmem:[%s1 + $0x38] sm:$0xf]
  %v78 = vld [vmem:[%s1 + $0x3c] sm:$0xf]
  %v79 = vld [vmem:[%s1 + $0x40] sm:$0xf]
  %v80 = vld [vmem:[%s1 + $0x44] sm:$0xf]
  %v81 = vld [vmem:[%s1 + $0x48] sm:$0xf]
  %v82 = vld [vmem:[%s1 + $0x4c] sm:$0xf]
  %v83 = vld [vmem:[%s1 + $0x50] sm:$0xf]
  %v84 = vld [vmem:[%s1 + $0x54] sm:$0xf]
  %v85 = vld [vmem:[%s1 + $0x58] sm:$0xf]
  %v86 = vld [vmem:[%s1 + $0x5c] sm:$0xf]
  %v87 = vld [vmem:[%s1 + $0x60] sm:$0xf]
  %v88 = vld [vmem:[%s1 + $0x64] sm:$0xf]
  %v89 = vld [vmem:[%s1 + $0x68] sm:$0xf]
  %v90 = vld [vmem:[%s1 + $0x6c] sm:$0xf]
  %v91 = vld [vmem:[%s1 + $0x70] sm:$0xf]
  %v92 = vld [vmem:[%s1 + $0x74] sm:$0xf]
  %v93 = vld [vmem:[%s1 + $0x78] sm:$0xf]
  %v94 = vld [vmem:[%s1 + $0x7c] sm:$0xf]
  %v95 = vld [vmem:[%s1 + $0x80] sm:$0xf]
  %v96 = vld [vmem:[%s1 + $0x84] sm:$0xf]
  %v97 = vld [vmem:[%s1 + $0x88] sm:$0xf]
  %v98 = vld [vmem:[%s1 + $0x8c] sm:$0xf]
  %v99 = vld [vmem:[%s1 + $0x90] sm:$0xf]
  %v100 = vld [vmem:[%s1 + $0x94] sm:$0xf]
  %v101 = vld [vmem:[%s1 + $0x98] sm:$0xf]
  %v102 = vld [vmem:[%s1 + $0x9c] sm:$0xf]
  %v103 = vld [vmem:[%s1 + $0xa0] sm:$0xf]
  %v104 = vld [vmem:[%s1 + $0xa4] sm:$0xf]
  %v105 = vld [vmem:[%s1 + $0xa8] sm:$0xf]
  %v106 = vld [vmem:[%s1 + $0xac] sm:$0xf]
  %v107 = vld [vmem:[%s1 + $0xb0] sm:$0xf]
  %v108 = vld [vmem:[%s1 + $0xb4] sm:$0xf]
  %v109 = vld [vmem:[%s1 + $0xb8] sm:$0xf]
  %v110 = vld [vmem:[%s1 + $0xbc] sm:$0xf]
  %v111 = vld [vmem:[%s1 + $0xc0] sm:$0xf]
  %v112 = vld [vmem:[%s1 + $0xc4] sm:$0xf]
  %v113 = vld [vmem:[%s1 + $0xc8] sm:$0xf]
  %v114 = vld [vmem:[%s1 + $0xcc] sm:$0xf]
  %v115 = vld [vmem:[%s1 + $0xd0] sm:$0xf]
  %v116 = vld [vmem:[%s1 + $0xd4] sm:$0xf]
  %v117 = vld [vmem:[%s1 + $0xd8] sm:$0xf]
  %v118 = vld [vmem:[%s1 + $0xdc] sm:$0xf]
  %v119 = vld [vmem:[%s1 + $0xe0] sm:$0xf]
  %v120 = vld [vmem:[%s1 + $0xe4] sm:$0xf]
  %v121 = vld [vmem:[%s1 + $0xe8] sm:$0xf]
  %v122 = vld [vmem:[%s1 + $0xec] sm:$0xf]
  %v123 = vld [vmem:[%s1 + $0xf0] sm:$0xf]
  %v124 = vld [vmem:[%s1 + $0xf4] sm:$0xf]
  %v125 = vld [vmem:[%s1 + $0xf8] sm:$0xf]
  %v126 = vld [vmem:[%s1 + $0xfc] sm:$0xf]
  %v127 = vld [vmem:[%s1 + $0x100] sm:$0xf]
  %v128 = vld [vmem:[%s1 + $0x104] sm:$0xf]
  %v129 = vld [vmem:[%s1 + $0x108] sm:$0xf]
  %v130 = vld [vmem:[%s1 + $0x10c] sm:$0xf]
  %v131 = vld [vmem:[%s1 + $0x110] sm:$0xf]
  %v132 = vld [vmem:[%s1 + $0x114] sm:$0xf]
  %v133 = vld [vmem:[%s1 + $0x118] sm:$0xf]
  %v134 = vld [vmem:[%s1 + $0x11c] sm:$0xf]
  %v135 = vld [vmem:[%s1 + $0x120] sm:$0xf]
  %v136 = vld [vmem:[%s1 + $0x124] sm:$0xf]
  %v137 = vld [vmem:[%s1 + $0x128] sm:$0xf]
  %v138 = vld [vmem:[%s1 + $0x12c] sm:$0xf]
  %v139 = vld [vmem:[%s1 + $0x130] sm:$0xf]
  %v140 = vld [vmem:[%s1 + $0x134] sm:$0xf]
  %v141 = vld [vmem:[%s1 + $0x138] sm:$0xf]
  %v142 = vld [vmem:[%s1 + $0x13c] sm:$0xf]
  %v143 = vld [vmem:[%s2] sm:$0x1]
  %v145 = vlaneseq
  %v146 = vshrl.u32 %v145, 7
  %v147 = vsub.s32 0, %v146
  %v148 = vrot.slane %v143, %v147
  %v198 = vunpack.c.l.b16 %v15
  %v199 = vunpack.c.h.b16 %v15
  %v200 = vunpack.c.l.b16 %v16
  %v201 = vunpack.c.h.b16 %v16
  %v202 = vunpack.c.l.b16 %v17
  %v203 = vunpack.c.l.b16 %v18
  %v204 = vunpack.c.h.b16 %v18
  %v205 = vunpack.c.l.b16 %v19
  %v206 = vunpack.c.h.b16 %v19
  %v207 = vunpack.c.l.b16 %v20
  %v208 = vunpack.c.l.b16 %v21
  %v209 = vunpack.c.h.b16 %v21
  %v210 = vunpack.c.l.b16 %v22
  %v211 = vunpack.c.h.b16 %v22
  %v212 = vunpack.c.l.b16 %v23
  %v213 = vunpack.c.l.b16 %v24
  %v214 = vunpack.c.h.b16 %v24
  %v215 = vunpack.c.l.b16 %v25
  %v216 = vunpack.c.h.b16 %v25
  %v217 = vunpack.c.l.b16 %v26
  %v218 = vunpack.c.l.b16 %v27
  %v219 = vunpack.c.h.b16 %v27
  %v220 = vunpack.c.l.b16 %v28
  %v221 = vunpack.c.h.b16 %v28
  %v222 = vunpack.c.l.b16 %v29
  %v223 = vunpack.c.l.b16 %v30
  %v224 = vunpack.c.h.b16 %v30
  %v225 = vunpack.c.l.b16 %v31
  %v226 = vunpack.c.h.b16 %v31
  %v227 = vunpack.c.l.b16 %v32
  %v228 = vunpack.c.l.b16 %v33
  %v229 = vunpack.c.h.b16 %v33
  %v230 = vunpack.c.l.b16 %v34
  %v231 = vunpack.c.h.b16 %v34
  %v232 = vunpack.c.l.b16 %v35
  %v233 = vunpack.c.l.b16 %v36
  %v234 = vunpack.c.h.b16 %v36
  %v235 = vunpack.c.l.b16 %v37
  %v236 = vunpack.c.h.b16 %v37
  %v237 = vunpack.c.l.b16 %v38
  %v238 = vunpack.c.l.b16 %v39
  %v239 = vunpack.c.h.b16 %v39
  %v240 = vunpack.c.l.b16 %v40
  %v241 = vunpack.c.h.b16 %v40
  %v242 = vunpack.c.l.b16 %v41
  %v243 = vunpack.c.l.b16 %v42
  %v244 = vunpack.c.h.b16 %v42
  %v245 = vunpack.c.l.b16 %v43
  %v246 = vunpack.c.h.b16 %v43
  %v247 = vunpack.c.l.b16 %v44
  %v248 = vunpack.c.l.b16 %v45
  %v249 = vunpack.c.h.b16 %v45
  %v250 = vunpack.c.l.b16 %v46
  %v251 = vunpack.c.h.b16 %v46
  %v252 = vunpack.c.l.b16 %v47
  %v253 = vunpack.c.l.b16 %v48
  %v254 = vunpack.c.h.b16 %v48
  %v255 = vunpack.c.l.b16 %v49
  %v256 = vunpack.c.h.b16 %v49
  %v257 = vunpack.c.l.b16 %v50
  %v258 = vunpack.c.l.b16 %v51
  %v259 = vunpack.c.h.b16 %v51
  %v260 = vunpack.c.l.b16 %v52
  %v261 = vunpack.c.h.b16 %v52
  %v262 = vunpack.c.l.b16 %v53
  %v263 = vunpack.c.l.b16 %v54
  %v264 = vunpack.c.h.b16 %v54
  %v265 = vunpack.c.l.b16 %v55
  %v266 = vunpack.c.h.b16 %v55
  %v267 = vunpack.c.l.b16 %v56
  %v268 = vunpack.c.l.b16 %v57
  %v269 = vunpack.c.h.b16 %v57
  %v270 = vunpack.c.l.b16 %v58
  %v271 = vunpack.c.h.b16 %v58
  %v272 = vunpack.c.l.b16 %v59
  %v273 = vunpack.c.l.b16 %v60
  %v274 = vunpack.c.h.b16 %v60
  %v275 = vunpack.c.l.b16 %v61
  %v276 = vunpack.c.h.b16 %v61
  %v277 = vunpack.c.l.b16 %v62
  %v278 = vpack.c.b16 %v203, %v198
  %v279 = vpack.c.b16 %v204, %v199
  %v280 = vpack.c.b16 %v205, %v200
  %v281 = vpack.c.b16 %v206, %v201
  %v282 = vpack.c.b16 %v207, %v202
  %v283 = vpack.c.b16 %v213, %v208
  %v284 = vpack.c.b16 %v214, %v209
  %v285 = vpack.c.b16 %v215, %v210
  %v286 = vpack.c.b16 %v216, %v211
  %v287 = vpack.c.b16 %v217, %v212
  %v288 = vpack.c.b16 %v223, %v218
  %v289 = vpack.c.b16 %v224, %v219
  %v290 = vpack.c.b16 %v225, %v220
  %v291 = vpack.c.b16 %v226, %v221
  %v292 = vpack.c.b16 %v227, %v222
  %v293 = vpack.c.b16 %v233, %v228
  %v294 = vpack.c.b16 %v234, %v229
  %v295 = vpack.c.b16 %v235, %v230
  %v296 = vpack.c.b16 %v236, %v231
  %v297 = vpack.c.b16 %v237, %v232
  %v298 = vpack.c.b16 %v243, %v238
  %v299 = vpack.c.b16 %v244, %v239
  %v300 = vpack.c.b16 %v245, %v240
  %v301 = vpack.c.b16 %v246, %v241
  %v302 = vpack.c.b16 %v247, %v242
  %v303 = vpack.c.b16 %v253, %v248
  %v304 = vpack.c.b16 %v254, %v249
  %v305 = vpack.c.b16 %v255, %v250
  %v306 = vpack.c.b16 %v256, %v251
  %v307 = vpack.c.b16 %v257, %v252
  %v308 = vpack.c.b16 %v263, %v258
  %v309 = vpack.c.b16 %v264, %v259
  %v310 = vpack.c.b16 %v265, %v260
  %v311 = vpack.c.b16 %v266, %v261
  %v312 = vpack.c.b16 %v267, %v262
  %v313 = vpack.c.b16 %v273, %v268
  %v314 = vpack.c.b16 %v274, %v269
  %v315 = vpack.c.b16 %v275, %v270
  %v316 = vpack.c.b16 %v276, %v271
  %v317 = vpack.c.b16 %v277, %v272
  %v438 = vunpack.c.l.b16 %v63
  %v439 = vunpack.c.l.b16 %v64
  %v440 = vunpack.c.l.b16 %v65
  %v441 = vunpack.c.l.b16 %v66
  %v442 = vunpack.c.l.b16 %v67
  %v443 = vunpack.c.l.b16 %v68
  %v444 = vunpack.c.l.b16 %v69
  %v445 = vunpack.c.l.b16 %v70
  %v446 = vunpack.c.l.b16 %v71
  %v447 = vunpack.c.l.b16 %v72
  %v448 = vunpack.c.l.b16 %v73
  %v449 = vunpack.c.l.b16 %v74
  %v450 = vunpack.c.l.b16 %v75
  %v451 = vunpack.c.l.b16 %v76
  %v452 = vunpack.c.l.b16 %v77
  %v453 = vunpack.c.l.b16 %v78
  %v454 = vunpack.c.l.b16 %v79
  %v455 = vunpack.c.l.b16 %v80
  %v456 = vunpack.c.l.b16 %v81
  %v457 = vunpack.c.l.b16 %v82
  %v458 = vunpack.c.l.b16 %v83
  %v459 = vunpack.c.l.b16 %v84
  %v460 = vunpack.c.l.b16 %v85
  %v461 = vunpack.c.l.b16 %v86
  %v462 = vunpack.c.l.b16 %v87
  %v463 = vunpack.c.l.b16 %v88
  %v464 = vunpack.c.l.b16 %v89
  %v465 = vunpack.c.l.b16 %v90
  %v466 = vunpack.c.l.b16 %v91
  %v467 = vunpack.c.l.b16 %v92
  %v468 = vunpack.c.l.b16 %v93
  %v469 = vunpack.c.l.b16 %v94
  %v470 = vunpack.c.l.b16 %v95
  %v471 = vunpack.c.l.b16 %v96
  %v472 = vunpack.c.l.b16 %v97
  %v473 = vunpack.c.l.b16 %v98
  %v474 = vunpack.c.l.b16 %v99
  %v475 = vunpack.c.l.b16 %v100
  %v476 = vunpack.c.l.b16 %v101
  %v477 = vunpack.c.l.b16 %v102
  %v478 = vunpack.c.l.b16 %v103
  %v479 = vunpack.c.l.b16 %v104
  %v480 = vunpack.c.l.b16 %v105
  %v481 = vunpack.c.l.b16 %v106
  %v482 = vunpack.c.l.b16 %v107
  %v483 = vunpack.c.l.b16 %v108
  %v484 = vunpack.c.l.b16 %v109
  %v485 = vunpack.c.l.b16 %v110
  %v486 = vunpack.c.l.b16 %v111
  %v487 = vunpack.c.l.b16 %v112
  %v488 = vunpack.c.l.b16 %v113
  %v489 = vunpack.c.l.b16 %v114
  %v490 = vunpack.c.l.b16 %v115
  %v491 = vunpack.c.l.b16 %v116
  %v492 = vunpack.c.l.b16 %v117
  %v493 = vunpack.c.l.b16 %v118
  %v494 = vunpack.c.l.b16 %v119
  %v495 = vunpack.c.l.b16 %v120
  %v496 = vunpack.c.l.b16 %v121
  %v497 = vunpack.c.l.b16 %v122
  %v498 = vunpack.c.l.b16 %v123
  %v499 = vunpack.c.l.b16 %v124
  %v500 = vunpack.c.l.b16 %v125
  %v501 = vunpack.c.l.b16 %v126
  %v502 = vunpack.c.l.b16 %v127
  %v503 = vunpack.c.l.b16 %v128
  %v504 = vunpack.c.l.b16 %v129
  %v505 = vunpack.c.l.b16 %v130
  %v506 = vunpack.c.l.b16 %v131
  %v507 = vunpack.c.l.b16 %v132
  %v508 = vunpack.c.l.b16 %v133
  %v509 = vunpack.c.l.b16 %v134
  %v510 = vunpack.c.l.b16 %v135
  %v511 = vunpack.c.l.b16 %v136
  %v512 = vunpack.c.l.b16 %v137
  %v513 = vunpack.c.l.b16 %v138
  %v514 = vunpack.c.l.b16 %v139
  %v515 = vunpack.c.l.b16 %v140
  %v516 = vunpack.c.l.b16 %v141
  %v517 = vunpack.c.l.b16 %v142
  %v518 = vpack.c.b16 %v439, %v438
  %v519 = vpack.c.b16 %v441, %v440
  %v520 = vpack.c.b16 %v443, %v442
  %v521 = vpack.c.b16 %v445, %v444
  %v522 = vpack.c.b16 %v447, %v446
  %v523 = vpack.c.b16 %v449, %v448
  %v524 = vpack.c.b16 %v451, %v450
  %v525 = vpack.c.b16 %v453, %v452
  %v526 = vpack.c.b16 %v455, %v454
  %v527 = vpack.c.b16 %v457, %v456
  %v528 = vpack.c.b16 %v459, %v458
  %v529 = vpack.c.b16 %v461, %v460
  %v530 = vpack.c.b16 %v463, %v462
  %v531 = vpack.c.b16 %v465, %v464
  %v532 = vpack.c.b16 %v467, %v466
  %v533 = vpack.c.b16 %v469, %v468
  %v534 = vpack.c.b16 %v471, %v470
  %v535 = vpack.c.b16 %v473, %v472
  %v536 = vpack.c.b16 %v475, %v474
  %v537 = vpack.c.b16 %v477, %v476
  %v538 = vpack.c.b16 %v479, %v478
  %v539 = vpack.c.b16 %v481, %v480
  %v540 = vpack.c.b16 %v483, %v482
  %v541 = vpack.c.b16 %v485, %v484
  %v542 = vpack.c.b16 %v487, %v486
  %v543 = vpack.c.b16 %v489, %v488
  %v544 = vpack.c.b16 %v491, %v490
  %v545 = vpack.c.b16 %v493, %v492
  %v546 = vpack.c.b16 %v495, %v494
  %v547 = vpack.c.b16 %v497, %v496
  %v548 = vpack.c.b16 %v499, %v498
  %v549 = vpack.c.b16 %v501, %v500
  %v550 = vpack.c.b16 %v503, %v502
  %v551 = vpack.c.b16 %v505, %v504
  %v552 = vpack.c.b16 %v507, %v506
  %v553 = vpack.c.b16 %v509, %v508
  %v554 = vpack.c.b16 %v511, %v510
  %v555 = vpack.c.b16 %v513, %v512
  %v556 = vpack.c.b16 %v515, %v514
  %v557 = vpack.c.b16 %v517, %v516
  %598 = vmatprep.subr.bf16.mxu0 0
  %599 = vmatpush1.bf16.msra.mxu0 %v525
  %600 = vmatprep.subr.bf16.mxu0 0
  %601 = vmatpush1.bf16.msra.mxu0 %v524
  %602 = vmatprep.subr.bf16.mxu0 0
  %603 = vmatpush1.bf16.msra.mxu0 %v523
  %604 = vmatprep.subr.bf16.mxu0 0
  %605 = vmatpush1.bf16.msra.mxu0 %v522
  %606 = vmatprep.subr.bf16.mxu0 0
  %607 = vmatpush1.bf16.msra.mxu0 %v521
  %608 = vmatprep.subr.bf16.mxu0 0
  %609 = vmatpush1.bf16.msra.mxu0 %v520
  %610 = vmatprep.subr.bf16.mxu0 0
  %611 = vmatpush1.bf16.msra.mxu0 %v519
  %612 = vmatprep.subr.bf16.mxu0 0
  %613 = vmatpush1.bf16.msra.mxu0 %v518
  %614 = vmatprep.subr.bf16.mxu0 0
  %615 = vmatpush2.bf16.msra.mxu0 %v533
  %616 = vmatprep.subr.bf16.mxu0 0
  %617 = vmatpush2.bf16.msra.mxu0 %v532
  %618 = vmatprep.subr.bf16.mxu0 0
  %619 = vmatpush2.bf16.msra.mxu0 %v531
  %620 = vmatprep.subr.bf16.mxu0 0
  %621 = vmatpush2.bf16.msra.mxu0 %v530
  %622 = vmatprep.subr.bf16.mxu0 0
  %623 = vmatpush2.bf16.msra.mxu0 %v529
  %624 = vmatprep.subr.bf16.mxu0 0
  %625 = vmatpush2.bf16.msra.mxu0 %v528
  %626 = vmatprep.subr.bf16.mxu0 0
  %627 = vmatpush2.bf16.msra.mxu0 %v527
  %628 = vmatprep.subr.bf16.mxu0 0
  %629 = vmatpush2.bf16.msra.mxu0 %v526
  %630 = vmatprep.mubr.bf16.mxu0 %v279
  %631 = vmatmul.mubr.bf16.gmra.mxu0 %v278
  %v632 = vpop.f32.mrf.mxu0
  %v633 = vadd.f32 %v148, %v632
  %v634 = vpop.f32.mrf.mxu0
  %v635 = vpop.f32.mrf.mxu0
  %v636 = vadd.f32 %v148, %v635
  %v637 = vpop.f32.mrf.mxu0
  %638 = vmatprep.mubr.bf16.mxu0 %v284
  %639 = vmatmul.mubr.bf16.gmra.mxu0 %v283
  %v640 = vpop.f32.mrf.mxu0
  %v641 = vadd.f32 %v148, %v640
  %v642 = vpop.f32.mrf.mxu0
  %v643 = vpop.f32.mrf.mxu0
  %v644 = vadd.f32 %v148, %v643
  %v645 = vpop.f32.mrf.mxu0
  %646 = vmatprep.mubr.bf16.mxu0 %v289
  %647 = vmatmul.mubr.bf16.gmra.mxu0 %v288
  %v648 = vpop.f32.mrf.mxu0
  %v649 = vadd.f32 %v148, %v648
  %v650 = vpop.f32.mrf.mxu0
  %v651 = vpop.f32.mrf.mxu0
  %v652 = vadd.f32 %v148, %v651
  %v653 = vpop.f32.mrf.mxu0
  %654 = vmatprep.mubr.bf16.mxu0 %v294
  %655 = vmatmul.mubr.bf16.gmra.mxu0 %v293
  %v656 = vpop.f32.mrf.mxu0
  %v657 = vadd.f32 %v148, %v656
  %v658 = vpop.f32.mrf.mxu0
  %v659 = vpop.f32.mrf.mxu0
  %v660 = vadd.f32 %v148, %v659
  %v661 = vpop.f32.mrf.mxu0
  %662 = vmatprep.mubr.bf16.mxu0 %v299
  %663 = vmatmul.mubr.bf16.gmra.mxu0 %v298
  %v664 = vpop.f32.mrf.mxu0
  %v665 = vadd.f32 %v148, %v664
  %v666 = vpop.f32.mrf.mxu0
  %v667 = vpop.f32.mrf.mxu0
  %v668 = vadd.f32 %v148, %v667
  %v669 = vpop.f32.mrf.mxu0
  %670 = vmatprep.mubr.bf16.mxu0 %v304
  %671 = vmatmul.mubr.bf16.gmra.mxu0 %v303
  %v672 = vpop.f32.mrf.mxu0
  %v673 = vadd.f32 %v148, %v672
  %v674 = vpop.f32.mrf.mxu0
  %v675 = vpop.f32.mrf.mxu0
  %v676 = vadd.f32 %v148, %v675
  %v677 = vpop.f32.mrf.mxu0
  %678 = vmatprep.mubr.bf16.mxu0 %v309
  %679 = vmatmul.mubr.bf16.gmra.mxu0 %v308
  %v680 = vpop.f32.mrf.mxu0
  %v681 = vadd.f32 %v148, %v680
  %v682 = vpop.f32.mrf.mxu0
  %v683 = vpop.f32.mrf.mxu0
  %v684 = vadd.f32 %v148, %v683
  %v685 = vpop.f32.mrf.mxu0
  %686 = vmatprep.mubr.bf16.mxu0 %v314
  %687 = vmatmul.mubr.bf16.gmra.mxu0 %v313
  %v688 = vpop.f32.mrf.mxu0
  %v689 = vadd.f32 %v148, %v688
  %v690 = vpop.f32.mrf.mxu0
  %v691 = vpop.f32.mrf.mxu0
  %v692 = vadd.f32 %v148, %v691
  %v693 = vpop.f32.mrf.mxu0
  %694 = vdwg.mxu0
  %695 = vmatprep.subr.bf16.mxu0 0
  %696 = vmatpush1.bf16.msra.mxu0 %v541
  %697 = vmatprep.subr.bf16.mxu0 0
  %698 = vmatpush1.bf16.msra.mxu0 %v540
  %699 = vmatprep.subr.bf16.mxu0 0
  %700 = vmatpush1.bf16.msra.mxu0 %v539
  %701 = vmatprep.subr.bf16.mxu0 0
  %702 = vmatpush1.bf16.msra.mxu0 %v538
  %703 = vmatprep.subr.bf16.mxu0 0
  %704 = vmatpush1.bf16.msra.mxu0 %v537
  %705 = vmatprep.subr.bf16.mxu0 0
  %706 = vmatpush1.bf16.msra.mxu0 %v536
  %707 = vmatprep.subr.bf16.mxu0 0
  %708 = vmatpush1.bf16.msra.mxu0 %v535
  %709 = vmatprep.subr.bf16.mxu0 0
  %710 = vmatpush1.bf16.msra.mxu0 %v534
  %711 = vmatprep.subr.bf16.mxu0 0
  %712 = vmatpush2.bf16.msra.mxu0 %v549
  %713 = vmatprep.subr.bf16.mxu0 0
  %714 = vmatpush2.bf16.msra.mxu0 %v548
  %715 = vmatprep.subr.bf16.mxu0 0
  %716 = vmatpush2.bf16.msra.mxu0 %v547
  %717 = vmatprep.subr.bf16.mxu0 0
  %718 = vmatpush2.bf16.msra.mxu0 %v546
  %719 = vmatprep.subr.bf16.mxu0 0
  %720 = vmatpush2.bf16.msra.mxu0 %v545
  %721 = vmatprep.subr.bf16.mxu0 0
  %722 = vmatpush2.bf16.msra.mxu0 %v544
  %723 = vmatprep.subr.bf16.mxu0 0
  %724 = vmatpush2.bf16.msra.mxu0 %v543
  %725 = vmatprep.subr.bf16.mxu0 0
  %726 = vmatpush2.bf16.msra.mxu0 %v542
  %727 = vmatprep.mubr.bf16.mxu0 %v281
  %728 = vmatmul.mubr.bf16.gmra.mxu0 %v280
  %v729 = vpop.f32.mrf.mxu0
  %v730 = vadd.f32 %v633, %v729
  %v731 = vpop.f32.mrf.mxu0
  %v732 = vpop.f32.mrf.mxu0
  %v733 = vadd.f32 %v636, %v732
  %v734 = vpop.f32.mrf.mxu0
  %735 = vmatprep.mubr.bf16.mxu0 %v286
  %736 = vmatmul.mubr.bf16.gmra.mxu0 %v285
  %v737 = vpop.f32.mrf.mxu0
  %v738 = vadd.f32 %v641, %v737
  %v739 = vpop.f32.mrf.mxu0
  %v740 = vpop.f32.mrf.mxu0
  %v741 = vadd.f32 %v644, %v740
  %v742 = vpop.f32.mrf.mxu0
  %743 = vmatprep.mubr.bf16.mxu0 %v291
  %744 = vmatmul.mubr.bf16.gmra.mxu0 %v290
  %v745 = vpop.f32.mrf.mxu0
  %v746 = vadd.f32 %v649, %v745
  %v747 = vpop.f32.mrf.mxu0
  %v748 = vpop.f32.mrf.mxu0
  %v749 = vadd.f32 %v652, %v748
  %v750 = vpop.f32.mrf.mxu0
  %751 = vmatprep.mubr.bf16.mxu0 %v296
  %752 = vmatmul.mubr.bf16.gmra.mxu0 %v295
  %v753 = vpop.f32.mrf.mxu0
  %v754 = vadd.f32 %v657, %v753
  %v755 = vpop.f32.mrf.mxu0
  %v756 = vpop.f32.mrf.mxu0
  %v757 = vadd.f32 %v660, %v756
  %v758 = vpop.f32.mrf.mxu0
  %759 = vmatprep.mubr.bf16.mxu0 %v301
  %760 = vmatmul.mubr.bf16.gmra.mxu0 %v300
  %v761 = vpop.f32.mrf.mxu0
  %v762 = vadd.f32 %v665, %v761
  %v763 = vpop.f32.mrf.mxu0
  %v764 = vpop.f32.mrf.mxu0
  %v765 = vadd.f32 %v668, %v764
  %v766 = vpop.f32.mrf.mxu0
  %767 = vmatprep.mubr.bf16.mxu0 %v306
  %768 = vmatmul.mubr.bf16.gmra.mxu0 %v305
  %v769 = vpop.f32.mrf.mxu0
  %v770 = vadd.f32 %v673, %v769
  %v771 = vpop.f32.mrf.mxu0
  %v772 = vpop.f32.mrf.mxu0
  %v773 = vadd.f32 %v676, %v772
  %v774 = vpop.f32.mrf.mxu0
  %775 = vmatprep.mubr.bf16.mxu0 %v311
  %776 = vmatmul.mubr.bf16.gmra.mxu0 %v310
  %v777 = vpop.f32.mrf.mxu0
  %v778 = vadd.f32 %v681, %v777
  %v779 = vpop.f32.mrf.mxu0
  %v780 = vpop.f32.mrf.mxu0
  %v781 = vadd.f32 %v684, %v780
  %v782 = vpop.f32.mrf.mxu0
  %783 = vmatprep.mubr.bf16.mxu0 %v316
  %784 = vmatmul.mubr.bf16.gmra.mxu0 %v315
  %v785 = vpop.f32.mrf.mxu0
  %v786 = vadd.f32 %v689, %v785
  %v787 = vpop.f32.mrf.mxu0
  %v788 = vpop.f32.mrf.mxu0
  %v789 = vadd.f32 %v692, %v788
  %v790 = vpop.f32.mrf.mxu0
  %791 = vdwg.mxu0
  %792 = vmatprep.subr.bf16.mxu0 0
  %793 = vmatpush1.bf16.msra.mxu0 %v557
  %794 = vmatprep.subr.bf16.mxu0 0
  %795 = vmatpush1.bf16.msra.mxu0 %v556
  %796 = vmatprep.subr.bf16.mxu0 0
  %797 = vmatpush1.bf16.msra.mxu0 %v555
  %798 = vmatprep.subr.bf16.mxu0 0
  %799 = vmatpush1.bf16.msra.mxu0 %v554
  %800 = vmatprep.subr.bf16.mxu0 0
  %801 = vmatpush1.bf16.msra.mxu0 %v553
  %802 = vmatprep.subr.bf16.mxu0 0
  %803 = vmatpush1.bf16.msra.mxu0 %v552
  %804 = vmatprep.subr.bf16.mxu0 0
  %805 = vmatpush1.bf16.msra.mxu0 %v551
  %806 = vmatprep.subr.bf16.mxu0 0
  %807 = vmatpush1.bf16.msra.mxu0 %v550
  %808 = vmatprep.subr.bf16.mxu0 0
  %809 = vmatpush2.bf16.msra.mxu0 0
  %810 = vmatprep.subr.bf16.mxu0 0
  %811 = vmatpush2.bf16.msra.mxu0 0
  %812 = vmatprep.subr.bf16.mxu0 0
  %813 = vmatpush2.bf16.msra.mxu0 0
  %814 = vmatprep.subr.bf16.mxu0 0
  %815 = vmatpush2.bf16.msra.mxu0 0
  %816 = vmatprep.subr.bf16.mxu0 0
  %817 = vmatpush2.bf16.msra.mxu0 0
  %818 = vmatprep.subr.bf16.mxu0 0
  %819 = vmatpush2.bf16.msra.mxu0 0
  %820 = vmatprep.subr.bf16.mxu0 0
  %821 = vmatpush2.bf16.msra.mxu0 0
  %822 = vmatprep.subr.bf16.mxu0 0
  %823 = vmatpush2.bf16.msra.mxu0 0
  %824 = vmatprep.mubr.bf16.mxu0 0
  %825 = vmatmul.mubr.bf16.gmra.mxu0 %v282
  %v826 = vpop.f32.mrf.mxu0
  %v827 = vadd.f32 %v730, %v826
  %v828 = vpop.f32.mrf.mxu0
  %v829 = vpop.f32.mrf.mxu0
  %v830 = vadd.f32 %v733, %v829
  %v831 = vpop.f32.mrf.mxu0
  %832 = vmatprep.mubr.bf16.mxu0 0
  %833 = vmatmul.mubr.bf16.gmra.mxu0 %v287
  %v834 = vpop.f32.mrf.mxu0
  %v835 = vadd.f32 %v738, %v834
  %v836 = vpop.f32.mrf.mxu0
  %v837 = vpop.f32.mrf.mxu0
  %v838 = vadd.f32 %v741, %v837
  %v839 = vpop.f32.mrf.mxu0
  %840 = vmatprep.mubr.bf16.mxu0 0
  %841 = vmatmul.mubr.bf16.gmra.mxu0 %v292
  %v842 = vpop.f32.mrf.mxu0
  %v843 = vadd.f32 %v746, %v842
  %v844 = vpop.f32.mrf.mxu0
  %v845 = vpop.f32.mrf.mxu0
  %v846 = vadd.f32 %v749, %v845
  %v847 = vpop.f32.mrf.mxu0
  %848 = vmatprep.mubr.bf16.mxu0 0
  %849 = vmatmul.mubr.bf16.gmra.mxu0 %v297
  %v850 = vpop.f32.mrf.mxu0
  %v851 = vadd.f32 %v754, %v850
  %v852 = vpop.f32.mrf.mxu0
  %v853 = vpop.f32.mrf.mxu0
  %v854 = vadd.f32 %v757, %v853
  %v855 = vpop.f32.mrf.mxu0
  %856 = vmatprep.mubr.bf16.mxu0 0
  %857 = vmatmul.mubr.bf16.gmra.mxu0 %v302
  %v858 = vpop.f32.mrf.mxu0
  %v859 = vadd.f32 %v762, %v858
  %v860 = vpop.f32.mrf.mxu0
  %v861 = vpop.f32.mrf.mxu0
  %v862 = vadd.f32 %v765, %v861
  %v863 = vpop.f32.mrf.mxu0
  %864 = vmatprep.mubr.bf16.mxu0 0
  %865 = vmatmul.mubr.bf16.gmra.mxu0 %v307
  %v866 = vpop.f32.mrf.mxu0
  %v867 = vadd.f32 %v770, %v866
  %v868 = vpop.f32.mrf.mxu0
  %v869 = vpop.f32.mrf.mxu0
  %v870 = vadd.f32 %v773, %v869
  %v871 = vpop.f32.mrf.mxu0
  %872 = vmatprep.mubr.bf16.mxu0 0
  %873 = vmatmul.mubr.bf16.gmra.mxu0 %v312
  %v874 = vpop.f32.mrf.mxu0
  %v875 = vadd.f32 %v778, %v874
  %v876 = vpop.f32.mrf.mxu0
  %v877 = vpop.f32.mrf.mxu0
  %v878 = vadd.f32 %v781, %v877
  %v879 = vpop.f32.mrf.mxu0
  %880 = vmatprep.mubr.bf16.mxu0 0
  %881 = vmatmul.mubr.bf16.gmra.mxu0 %v317
  %v882 = vpop.f32.mrf.mxu0
  %v883 = vadd.f32 %v786, %v882
  %v884 = vpop.f32.mrf.mxu0
  %v885 = vpop.f32.mrf.mxu0
  %v886 = vadd.f32 %v789, %v885
  %v887 = vpop.f32.mrf.mxu0
  %888 = vdwg.mxu0
  %v889 = vmax.f32 %v827, 0.0
  %v890 = vmax.f32 %v830, 0.0
  %v891 = vmax.f32 %v835, 0.0
  %v892 = vmax.f32 %v838, 0.0
  %v893 = vmax.f32 %v843, 0.0
  %v894 = vmax.f32 %v846, 0.0
  %v895 = vmax.f32 %v851, 0.0
  %v896 = vmax.f32 %v854, 0.0
  %v897 = vmax.f32 %v859, 0.0
  %v898 = vmax.f32 %v862, 0.0
  %v899 = vmax.f32 %v867, 0.0
  %v900 = vmax.f32 %v870, 0.0
  %v901 = vmax.f32 %v875, 0.0
  %v902 = vmax.f32 %v878, 0.0
  %v903 = vmax.f32 %v883, 0.0
  %v904 = vmax.f32 %v886, 0.0
  %v905 = vpack.c.bf16 %v890, %v889
  %v906 = vpack.c.bf16 %v892, %v891
  %v907 = vpack.c.bf16 %v894, %v893
  %v908 = vpack.c.bf16 %v896, %v895
  %v909 = vpack.c.bf16 %v898, %v897
  %v910 = vpack.c.bf16 %v900, %v899
  %v911 = vpack.c.bf16 %v902, %v901
  %v912 = vpack.c.bf16 %v904, %v903
  %v921 = vunpack.c.l.b16 %v905
  %v922 = vunpack.c.h.b16 %v905
  %v923 = vunpack.c.l.b16 %v906
  %v924 = vunpack.c.h.b16 %v906
  %v925 = vunpack.c.l.b16 %v907
  %v926 = vunpack.c.h.b16 %v907
  %v927 = vunpack.c.l.b16 %v908
  %v928 = vunpack.c.h.b16 %v908
  %v929 = vunpack.c.l.b16 %v909
  %v930 = vunpack.c.h.b16 %v909
  %v931 = vunpack.c.l.b16 %v910
  %v932 = vunpack.c.h.b16 %v910
  %v933 = vunpack.c.l.b16 %v911
  %v934 = vunpack.c.h.b16 %v911
  %v935 = vunpack.c.l.b16 %v912
  %v936 = vunpack.c.h.b16 %v912
  %v937 = vpack.c.b16 %v921, %v921
  %v938 = vpack.c.b16 %v922, %v922
  %v939 = vpack.c.b16 %v923, %v923
  %v940 = vpack.c.b16 %v924, %v924
  %v941 = vpack.c.b16 %v925, %v925
  %v942 = vpack.c.b16 %v926, %v926
  %v943 = vpack.c.b16 %v927, %v927
  %v944 = vpack.c.b16 %v928, %v928
  %v945 = vpack.c.b16 %v929, %v929
  %v946 = vpack.c.b16 %v930, %v930
  %v947 = vpack.c.b16 %v931, %v931
  %v948 = vpack.c.b16 %v932, %v932
  %v949 = vpack.c.b16 %v933, %v933
  %v950 = vpack.c.b16 %v934, %v934
  %v951 = vpack.c.b16 %v935, %v935
  %v952 = vpack.c.b16 %v936, %v936
  %969 = vst [vmem:[%s3] sm:$0xf] %v937
  %970 = vst [vmem:[%s3 + $0x4] sm:$0xf] %v938
  %971 = vst [vmem:[%s3 + $0x8] sm:$0xf] %v939
  %972 = vst [vmem:[%s3 + $0xc] sm:$0xf] %v940
  %973 = vst [vmem:[%s3 + $0x10] sm:$0xf] %v941
  %974 = vst [vmem:[%s3 + $0x14] sm:$0xf] %v942
  %975 = vst [vmem:[%s3 + $0x18] sm:$0xf] %v943
  %976 = vst [vmem:[%s3 + $0x1c] sm:$0xf] %v944
  %977 = vst [vmem:[%s3 + $0x20] sm:$0xf] %v945
  %978 = vst [vmem:[%s3 + $0x24] sm:$0xf] %v946
  %979 = vst [vmem:[%s3 + $0x28] sm:$0xf] %v947
  %980 = vst [vmem:[%s3 + $0x2c] sm:$0xf] %v948
  %981 = vst [vmem:[%s3 + $0x30] sm:$0xf] %v949
  %982 = vst [vmem:[%s3 + $0x34] sm:$0xf] %v950
  %983 = vst [vmem:[%s3 + $0x38] sm:$0xf] %v951
  %984 = vst [vmem:[%s3 + $0x3c] sm:$0xf] %v952
  // Predicated region
  $region14: #{resnet_encoder_forward.6} parent=0 // pred_check
    _
  $region15: #{resnet_encoder_forward.6} parent=0 // pred_check_branch
    %986 = sbr.rel (0) target = $region17
  $region16: #{resnet_encoder_forward.6} parent=0 // pred_region
    _
  $region17: #{resnet_encoder_forward.6} parent=0 // pred_fallthru
    _
  // Predicated region
  $region18: #{resnet_encoder_forward.6} parent=0 // pred_check
    _
  $region19: #{resnet_encoder_forward.6} parent=0 // pred_check_branch
    %988 = sbr.rel (0) target = $region21
  $region20: #{resnet_encoder_forward.6} parent=0 // pred_region
    _
  $region21: #{resnet_encoder_forward.6} parent=0 // pred_fallthru
    _

// kernel: resnet_encoder_forward.7
$region0: #{resnet_encoder_forward.7}
  #allocation0 [shape = 'u32[]', space=smem, size = 0x4, offset = 0x4, fixed_abs, tag = 'smem constant byte address 0x4 - core index']
  #allocation1 [shape = 'u32[144,128]{1,0:T(1,128)}', space=vmem, size = 0x12000, scoped, tag = 'internal scratch']
  %s0 = inlined_call_operand.vmem [shape: bf16[128,640], index: 0, kind: input, shape index: {}]
  %s1 = inlined_call_operand.vmem [shape: bf16[640,128], index: 1, kind: input, shape index: {}]
  %s2 = inlined_call_operand.vmem [shape: f32[1,128], index: 2, kind: input, shape index: {}]
  %s3 = inlined_call_operand.vmem [shape: bf16[128,128], index: 3, kind: input, shape index: {}]
  %s4 = inlined_call_operand.vmem [shape: bf16[128,128], index: 4, kind: output, shape index: {}]
  %s5 = sld [smem:[#allocation0]]
  $region26: #{resnet_encoder_forward.7} parent=0
    _
  %s7 = ssub.s32 1, %s5
  %s8 = scalar_select 0, %s7, %s5
  // Predicated region
  $region2: #{resnet_encoder_forward.7} parent=0 // pred_check
    _
  $region3: #{resnet_encoder_forward.7} parent=0 // pred_check_branch
    %10 = sbr.rel (0) target = $region5
  $region4: #{resnet_encoder_forward.7} parent=0 // pred_region
    _
  $region5: #{resnet_encoder_forward.7} parent=0 // pred_fallthru
    _
  // Predicated region
  $region6: #{resnet_encoder_forward.7} parent=0 // pred_check
    _
  $region7: #{resnet_encoder_forward.7} parent=0 // pred_check_branch
    %12 = sbr.rel (0) target = $region9
  $region8: #{resnet_encoder_forward.7} parent=0 // pred_region
    _
  $region9: #{resnet_encoder_forward.7} parent=0 // pred_fallthru
    _
  // Predicated region
  $region10: #{resnet_encoder_forward.7} parent=0 // pred_check
    _
  $region11: #{resnet_encoder_forward.7} parent=0 // pred_check_branch
    %14 = sbr.rel (0) target = $region13
  $region12: #{resnet_encoder_forward.7} parent=0 // pred_region
    _
  $region13: #{resnet_encoder_forward.7} parent=0 // pred_fallthru
    _
  // Predicated region
  $region14: #{resnet_encoder_forward.7} parent=0 // pred_check
    _
  $region15: #{resnet_encoder_forward.7} parent=0 // pred_check_branch
    %16 = sbr.rel (0) target = $region17
  $region16: #{resnet_encoder_forward.7} parent=0 // pred_region
    _
  $region17: #{resnet_encoder_forward.7} parent=0 // pred_fallthru
    _
  %v18 = vld [vmem:[%s0] sm:$0xff]
  %v19 = vld [vmem:[%s0 + $0x8] sm:$0xff]
  %v20 = vld [vmem:[%s0 + $0x10] sm:$0xf]
  %v21 = vld [vmem:[%s0 + $0x14] sm:$0xff]
  %v22 = vld [vmem:[%s0 + $0x1c] sm:$0xff]
  %v23 = vld [vmem:[%s0 + $0x24] sm:$0xf]
  %v24 = vld [vmem:[%s0 + $0x28] sm:$0xff]
  %v25 = vld [vmem:[%s0 + $0x30] sm:$0xff]
  %v26 = vld [vmem:[%s0 + $0x38] sm:$0xf]
  %v27 = vld [vmem:[%s0 + $0x3c] sm:$0xff]
  %v28 = vld [vmem:[%s0 + $0x44] sm:$0xff]
  %v29 = vld [vmem:[%s0 + $0x4c] sm:$0xf]
  %v30 = vld [vmem:[%s0 + $0x50] sm:$0xff]
  %v31 = vld [vmem:[%s0 + $0x58] sm:$0xff]
  %v32 = vld [vmem:[%s0 + $0x60] sm:$0xf]
  %v33 = vld [vmem:[%s0 + $0x64] sm:$0xff]
  %v34 = vld [vmem:[%s0 + $0x6c] sm:$0xff]
  %v35 = vld [vmem:[%s0 + $0x74] sm:$0xf]
  %v36 = vld [vmem:[%s0 + $0x78] sm:$0xff]
  %v37 = vld [vmem:[%s0 + $0x80] sm:$0xff]
  %v38 = vld [vmem:[%s0 + $0x88] sm:$0xf]
  %v39 = vld [vmem:[%s0 + $0x8c] sm:$0xff]
  %v40 = vld [vmem:[%s0 + $0x94] sm:$0xff]
  %v41 = vld [vmem:[%s0 + $0x9c] sm:$0xf]
  %v42 = vld [vmem:[%s0 + $0xa0] sm:$0xff]
  %v43 = vld [vmem:[%s0 + $0xa8] sm:$0xff]
  %v44 = vld [vmem:[%s0 + $0xb0] sm:$0xf]
  %v45 = vld [vmem:[%s0 + $0xb4] sm:$0xff]
  %v46 = vld [vmem:[%s0 + $0xbc] sm:$0xff]
  %v47 = vld [vmem:[%s0 + $0xc4] sm:$0xf]
  %v48 = vld [vmem:[%s0 + $0xc8] sm:$0xff]
  %v49 = vld [vmem:[%s0 + $0xd0] sm:$0xff]
  %v50 = vld [vmem:[%s0 + $0xd8] sm:$0xf]
  %v51 = vld [vmem:[%s0 + $0xdc] sm:$0xff]
  %v52 = vld [vmem:[%s0 + $0xe4] sm:$0xff]
  %v53 = vld [vmem:[%s0 + $0xec] sm:$0xf]
  %v54 = vld [vmem:[%s0 + $0xf0] sm:$0xff]
  %v55 = vld [vmem:[%s0 + $0xf8] sm:$0xff]
  %v56 = vld [vmem:[%s0 + $0x100] sm:$0xf]
  %v57 = vld [vmem:[%s0 + $0x104] sm:$0xff]
  %v58 = vld [vmem:[%s0 + $0x10c] sm:$0xff]
  %v59 = vld [vmem:[%s0 + $0x114] sm:$0xf]
  %v60 = vld [vmem:[%s0 + $0x118] sm:$0xff]
  %v61 = vld [vmem:[%s0 + $0x120] sm:$0xff]
  %v62 = vld [vmem:[%s0 + $0x128] sm:$0xf]
  %v63 = vld [vmem:[%s0 + $0x12c] sm:$0xff]
  %v64 = vld [vmem:[%s0 + $0x134] sm:$0xff]
  %v65 = vld [vmem:[%s0 + $0x13c] sm:$0xf]
  %v66 = vld [vmem:[%s1] sm:$0xf]
  %v67 = vld [vmem:[%s1 + $0x4] sm:$0xf]
  %v68 = vld [vmem:[%s1 + $0x8] sm:$0xf]
  %v69 = vld [vmem:[%s1 + $0xc] sm:$0xf]
  %v70 = vld [vmem:[%s1 + $0x10] sm:$0xf]
  %v71 = vld [vmem:[%s1 + $0x14] sm:$0xf]
  %v72 = vld [vmem:[%s1 + $0x18] sm:$0xf]
  %v73 = vld [vmem:[%s1 + $0x1c] sm:$0xf]
  %v74 = vld [vmem:[%s1 + $0x20] sm:$0xf]
  %v75 = vld [vmem:[%s1 + $0x24] sm:$0xf]
  %v76 = vld [vmem:[%s1 + $0x28] sm:$0xf]
  %v77 = vld [vmem:[%s1 + $0x2c] sm:$0xf]
  %v78 = vld [vmem:[%s1 + $0x30] sm:$0xf]
  %v79 = vld [vmem:[%s1 + $0x34] sm:$0xf]
  %v80 = vld [vmem:[%s1 + $0x38] sm:$0xf]
  %v81 = vld [vmem:[%s1 + $0x3c] sm:$0xf]
  %v82 = vld [vmem:[%s1 + $0x40] sm:$0xf]
  %v83 = vld [vmem:[%s1 + $0x44] sm:$0xf]
  %v84 = vld [vmem:[%s1 + $0x48] sm:$0xf]
  %v85 = vld [vmem:[%s1 + $0x4c] sm:$0xf]
  %v86 = vld [vmem:[%s1 + $0x50] sm:$0xf]
  %v87 = vld [vmem:[%s1 + $0x54] sm:$0xf]
  %v88 = vld [vmem:[%s1 + $0x58] sm:$0xf]
  %v89 = vld [vmem:[%s1 + $0x5c] sm:$0xf]
  %v90 = vld [vmem:[%s1 + $0x60] sm:$0xf]
  %v91 = vld [vmem:[%s1 + $0x64] sm:$0xf]
  %v92 = vld [vmem:[%s1 + $0x68] sm:$0xf]
  %v93 = vld [vmem:[%s1 + $0x6c] sm:$0xf]
  %v94 = vld [vmem:[%s1 + $0x70] sm:$0xf]
  %v95 = vld [vmem:[%s1 + $0x74] sm:$0xf]
  %v96 = vld [vmem:[%s1 + $0x78] sm:$0xf]
  %v97 = vld [vmem:[%s1 + $0x7c] sm:$0xf]
  %v98 = vld [vmem:[%s1 + $0x80] sm:$0xf]
  %v99 = vld [vmem:[%s1 + $0x84] sm:$0xf]
  %v100 = vld [vmem:[%s1 + $0x88] sm:$0xf]
  %v101 = vld [vmem:[%s1 + $0x8c] sm:$0xf]
  %v102 = vld [vmem:[%s1 + $0x90] sm:$0xf]
  %v103 = vld [vmem:[%s1 + $0x94] sm:$0xf]
  %v104 = vld [vmem:[%s1 + $0x98] sm:$0xf]
  %v105 = vld [vmem:[%s1 + $0x9c] sm:$0xf]
  %v106 = vld [vmem:[%s1 + $0xa0] sm:$0xf]
  %v107 = vld [vmem:[%s1 + $0xa4] sm:$0xf]
  %v108 = vld [vmem:[%s1 + $0xa8] sm:$0xf]
  %v109 = vld [vmem:[%s1 + $0xac] sm:$0xf]
  %v110 = vld [vmem:[%s1 + $0xb0] sm:$0xf]
  %v111 = vld [vmem:[%s1 + $0xb4] sm:$0xf]
  %v112 = vld [vmem:[%s1 + $0xb8] sm:$0xf]
  %v113 = vld [vmem:[%s1 + $0xbc] sm:$0xf]
  %v114 = vld [vmem:[%s1 + $0xc0] sm:$0xf]
  %v115 = vld [vmem:[%s1 + $0xc4] sm:$0xf]
  %v116 = vld [vmem:[%s1 + $0xc8] sm:$0xf]
  %v117 = vld [vmem:[%s1 + $0xcc] sm:$0xf]
  %v118 = vld [vmem:[%s1 + $0xd0] sm:$0xf]
  %v119 = vld [vmem:[%s1 + $0xd4] sm:$0xf]
  %v120 = vld [vmem:[%s1 + $0xd8] sm:$0xf]
  %v121 = vld [vmem:[%s1 + $0xdc] sm:$0xf]
  %v122 = vld [vmem:[%s1 + $0xe0] sm:$0xf]
  %v123 = vld [vmem:[%s1 + $0xe4] sm:$0xf]
  %v124 = vld [vmem:[%s1 + $0xe8] sm:$0xf]
  %v125 = vld [vmem:[%s1 + $0xec] sm:$0xf]
  %v126 = vld [vmem:[%s1 + $0xf0] sm:$0xf]
  %v127 = vld [vmem:[%s1 + $0xf4] sm:$0xf]
  %v128 = vld [vmem:[%s1 + $0xf8] sm:$0xf]
  %v129 = vld [vmem:[%s1 + $0xfc] sm:$0xf]
  %v130 = vld [vmem:[%s1 + $0x100] sm:$0xf]
  %v131 = vld [vmem:[%s1 + $0x104] sm:$0xf]
  %v132 = vld [vmem:[%s1 + $0x108] sm:$0xf]
  %v133 = vld [vmem:[%s1 + $0x10c] sm:$0xf]
  %v134 = vld [vmem:[%s1 + $0x110] sm:$0xf]
  %v135 = vld [vmem:[%s1 + $0x114] sm:$0xf]
  %v136 = vld [vmem:[%s1 + $0x118] sm:$0xf]
  %v137 = vld [vmem:[%s1 + $0x11c] sm:$0xf]
  %v138 = vld [vmem:[%s1 + $0x120] sm:$0xf]
  %v139 = vld [vmem:[%s1 + $0x124] sm:$0xf]
  %v140 = vld [vmem:[%s1 + $0x128] sm:$0xf]
  %v141 = vld [vmem:[%s1 + $0x12c] sm:$0xf]
  %v142 = vld [vmem:[%s1 + $0x130] sm:$0xf]
  %v143 = vld [vmem:[%s1 + $0x134] sm:$0xf]
  %v144 = vld [vmem:[%s1 + $0x138] sm:$0xf]
  %v145 = vld [vmem:[%s1 + $0x13c] sm:$0xf]
  %v146 = vld [vmem:[%s2] sm:$0x1]
  %v148 = vlaneseq
  %v149 = vshrl.u32 %v148, 7
  %v150 = vsub.s32 0, %v149
  %v151 = vrot.slane %v146, %v150
  %v201 = vunpack.c.l.b16 %v18
  %v202 = vunpack.c.h.b16 %v18
  %v203 = vunpack.c.l.b16 %v19
  %v204 = vunpack.c.h.b16 %v19
  %v205 = vunpack.c.l.b16 %v20
  %v206 = vunpack.c.l.b16 %v21
  %v207 = vunpack.c.h.b16 %v21
  %v208 = vunpack.c.l.b16 %v22
  %v209 = vunpack.c.h.b16 %v22
  %v210 = vunpack.c.l.b16 %v23
  %v211 = vunpack.c.l.b16 %v24
  %v212 = vunpack.c.h.b16 %v24
  %v213 = vunpack.c.l.b16 %v25
  %v214 = vunpack.c.h.b16 %v25
  %v215 = vunpack.c.l.b16 %v26
  %v216 = vunpack.c.l.b16 %v27
  %v217 = vunpack.c.h.b16 %v27
  %v218 = vunpack.c.l.b16 %v28
  %v219 = vunpack.c.h.b16 %v28
  %v220 = vunpack.c.l.b16 %v29
  %v221 = vunpack.c.l.b16 %v30
  %v222 = vunpack.c.h.b16 %v30
  %v223 = vunpack.c.l.b16 %v31
  %v224 = vunpack.c.h.b16 %v31
  %v225 = vunpack.c.l.b16 %v32
  %v226 = vunpack.c.l.b16 %v33
  %v227 = vunpack.c.h.b16 %v33
  %v228 = vunpack.c.l.b16 %v34
  %v229 = vunpack.c.h.b16 %v34
  %v230 = vunpack.c.l.b16 %v35
  %v231 = vunpack.c.l.b16 %v36
  %v232 = vunpack.c.h.b16 %v36
  %v233 = vunpack.c.l.b16 %v37
  %v234 = vunpack.c.h.b16 %v37
  %v235 = vunpack.c.l.b16 %v38
  %v236 = vunpack.c.l.b16 %v39
  %v237 = vunpack.c.h.b16 %v39
  %v238 = vunpack.c.l.b16 %v40
  %v239 = vunpack.c.h.b16 %v40
  %v240 = vunpack.c.l.b16 %v41
  %v241 = vunpack.c.l.b16 %v42
  %v242 = vunpack.c.h.b16 %v42
  %v243 = vunpack.c.l.b16 %v43
  %v244 = vunpack.c.h.b16 %v43
  %v245 = vunpack.c.l.b16 %v44
  %v246 = vunpack.c.l.b16 %v45
  %v247 = vunpack.c.h.b16 %v45
  %v248 = vunpack.c.l.b16 %v46
  %v249 = vunpack.c.h.b16 %v46
  %v250 = vunpack.c.l.b16 %v47
  %v251 = vunpack.c.l.b16 %v48
  %v252 = vunpack.c.h.b16 %v48
  %v253 = vunpack.c.l.b16 %v49
  %v254 = vunpack.c.h.b16 %v49
  %v255 = vunpack.c.l.b16 %v50
  %v256 = vunpack.c.l.b16 %v51
  %v257 = vunpack.c.h.b16 %v51
  %v258 = vunpack.c.l.b16 %v52
  %v259 = vunpack.c.h.b16 %v52
  %v260 = vunpack.c.l.b16 %v53
  %v261 = vunpack.c.l.b16 %v54
  %v262 = vunpack.c.h.b16 %v54
  %v263 = vunpack.c.l.b16 %v55
  %v264 = vunpack.c.h.b16 %v55
  %v265 = vunpack.c.l.b16 %v56
  %v266 = vunpack.c.l.b16 %v57
  %v267 = vunpack.c.h.b16 %v57
  %v268 = vunpack.c.l.b16 %v58
  %v269 = vunpack.c.h.b16 %v58
  %v270 = vunpack.c.l.b16 %v59
  %v271 = vunpack.c.l.b16 %v60
  %v272 = vunpack.c.h.b16 %v60
  %v273 = vunpack.c.l.b16 %v61
  %v274 = vunpack.c.h.b16 %v61
  %v275 = vunpack.c.l.b16 %v62
  %v276 = vunpack.c.l.b16 %v63
  %v277 = vunpack.c.h.b16 %v63
  %v278 = vunpack.c.l.b16 %v64
  %v279 = vunpack.c.h.b16 %v64
  %v280 = vunpack.c.l.b16 %v65
  %v281 = vpack.c.b16 %v206, %v201
  %v282 = vpack.c.b16 %v207, %v202
  %v283 = vpack.c.b16 %v208, %v203
  %v284 = vpack.c.b16 %v209, %v204
  %v285 = vpack.c.b16 %v210, %v205
  %v286 = vpack.c.b16 %v216, %v211
  %v287 = vpack.c.b16 %v217, %v212
  %v288 = vpack.c.b16 %v218, %v213
  %v289 = vpack.c.b16 %v219, %v214
  %v290 = vpack.c.b16 %v220, %v215
  %v291 = vpack.c.b16 %v226, %v221
  %v292 = vpack.c.b16 %v227, %v222
  %v293 = vpack.c.b16 %v228, %v223
  %v294 = vpack.c.b16 %v229, %v224
  %v295 = vpack.c.b16 %v230, %v225
  %v296 = vpack.c.b16 %v236, %v231
  %v297 = vpack.c.b16 %v237, %v232
  %v298 = vpack.c.b16 %v238, %v233
  %v299 = vpack.c.b16 %v239, %v234
  %v300 = vpack.c.b16 %v240, %v235
  %v301 = vpack.c.b16 %v246, %v241
  %v302 = vpack.c.b16 %v247, %v242
  %v303 = vpack.c.b16 %v248, %v243
  %v304 = vpack.c.b16 %v249, %v244
  %v305 = vpack.c.b16 %v250, %v245
  %v306 = vpack.c.b16 %v256, %v251
  %v307 = vpack.c.b16 %v257, %v252
  %v308 = vpack.c.b16 %v258, %v253
  %v309 = vpack.c.b16 %v259, %v254
  %v310 = vpack.c.b16 %v260, %v255
  %v311 = vpack.c.b16 %v266, %v261
  %v312 = vpack.c.b16 %v267, %v262
  %v313 = vpack.c.b16 %v268, %v263
  %v314 = vpack.c.b16 %v269, %v264
  %v315 = vpack.c.b16 %v270, %v265
  %v316 = vpack.c.b16 %v276, %v271
  %v317 = vpack.c.b16 %v277, %v272
  %v318 = vpack.c.b16 %v278, %v273
  %v319 = vpack.c.b16 %v279, %v274
  %v320 = vpack.c.b16 %v280, %v275
  %v441 = vunpack.c.l.b16 %v66
  %v442 = vunpack.c.l.b16 %v67
  %v443 = vunpack.c.l.b16 %v68
  %v444 = vunpack.c.l.b16 %v69
  %v445 = vunpack.c.l.b16 %v70
  %v446 = vunpack.c.l.b16 %v71
  %v447 = vunpack.c.l.b16 %v72
  %v448 = vunpack.c.l.b16 %v73
  %v449 = vunpack.c.l.b16 %v74
  %v450 = vunpack.c.l.b16 %v75
  %v451 = vunpack.c.l.b16 %v76
  %v452 = vunpack.c.l.b16 %v77
  %v453 = vunpack.c.l.b16 %v78
  %v454 = vunpack.c.l.b16 %v79
  %v455 = vunpack.c.l.b16 %v80
  %v456 = vunpack.c.l.b16 %v81
  %v457 = vunpack.c.l.b16 %v82
  %v458 = vunpack.c.l.b16 %v83
  %v459 = vunpack.c.l.b16 %v84
  %v460 = vunpack.c.l.b16 %v85
  %v461 = vunpack.c.l.b16 %v86
  %v462 = vunpack.c.l.b16 %v87
  %v463 = vunpack.c.l.b16 %v88
  %v464 = vunpack.c.l.b16 %v89
  %v465 = vunpack.c.l.b16 %v90
  %v466 = vunpack.c.l.b16 %v91
  %v467 = vunpack.c.l.b16 %v92
  %v468 = vunpack.c.l.b16 %v93
  %v469 = vunpack.c.l.b16 %v94
  %v470 = vunpack.c.l.b16 %v95
  %v471 = vunpack.c.l.b16 %v96
  %v472 = vunpack.c.l.b16 %v97
  %v473 = vunpack.c.l.b16 %v98
  %v474 = vunpack.c.l.b16 %v99
  %v475 = vunpack.c.l.b16 %v100
  %v476 = vunpack.c.l.b16 %v101
  %v477 = vunpack.c.l.b16 %v102
  %v478 = vunpack.c.l.b16 %v103
  %v479 = vunpack.c.l.b16 %v104
  %v480 = vunpack.c.l.b16 %v105
  %v481 = vunpack.c.l.b16 %v106
  %v482 = vunpack.c.l.b16 %v107
  %v483 = vunpack.c.l.b16 %v108
  %v484 = vunpack.c.l.b16 %v109
  %v485 = vunpack.c.l.b16 %v110
  %v486 = vunpack.c.l.b16 %v111
  %v487 = vunpack.c.l.b16 %v112
  %v488 = vunpack.c.l.b16 %v113
  %v489 = vunpack.c.l.b16 %v114
  %v490 = vunpack.c.l.b16 %v115
  %v491 = vunpack.c.l.b16 %v116
  %v492 = vunpack.c.l.b16 %v117
  %v493 = vunpack.c.l.b16 %v118
  %v494 = vunpack.c.l.b16 %v119
  %v495 = vunpack.c.l.b16 %v120
  %v496 = vunpack.c.l.b16 %v121
  %v497 = vunpack.c.l.b16 %v122
  %v498 = vunpack.c.l.b16 %v123
  %v499 = vunpack.c.l.b16 %v124
  %v500 = vunpack.c.l.b16 %v125
  %v501 = vunpack.c.l.b16 %v126
  %v502 = vunpack.c.l.b16 %v127
  %v503 = vunpack.c.l.b16 %v128
  %v504 = vunpack.c.l.b16 %v129
  %v505 = vunpack.c.l.b16 %v130
  %v506 = vunpack.c.l.b16 %v131
  %v507 = vunpack.c.l.b16 %v132
  %v508 = vunpack.c.l.b16 %v133
  %v509 = vunpack.c.l.b16 %v134
  %v510 = vunpack.c.l.b16 %v135
  %v511 = vunpack.c.l.b16 %v136
  %v512 = vunpack.c.l.b16 %v137
  %v513 = vunpack.c.l.b16 %v138
  %v514 = vunpack.c.l.b16 %v139
  %v515 = vunpack.c.l.b16 %v140
  %v516 = vunpack.c.l.b16 %v141
  %v517 = vunpack.c.l.b16 %v142
  %v518 = vunpack.c.l.b16 %v143
  %v519 = vunpack.c.l.b16 %v144
  %v520 = vunpack.c.l.b16 %v145
  %v521 = vpack.c.b16 %v442, %v441
  %v522 = vpack.c.b16 %v444, %v443
  %v523 = vpack.c.b16 %v446, %v445
  %v524 = vpack.c.b16 %v448, %v447
  %v525 = vpack.c.b16 %v450, %v449
  %v526 = vpack.c.b16 %v452, %v451
  %v527 = vpack.c.b16 %v454, %v453
  %v528 = vpack.c.b16 %v456, %v455
  %v529 = vpack.c.b16 %v458, %v457
  %v530 = vpack.c.b16 %v460, %v459
  %v531 = vpack.c.b16 %v462, %v461
  %v532 = vpack.c.b16 %v464, %v463
  %v533 = vpack.c.b16 %v466, %v465
  %v534 = vpack.c.b16 %v468, %v467
  %v535 = vpack.c.b16 %v470, %v469
  %v536 = vpack.c.b16 %v472, %v471
  %v537 = vpack.c.b16 %v474, %v473
  %v538 = vpack.c.b16 %v476, %v475
  %v539 = vpack.c.b16 %v478, %v477
  %v540 = vpack.c.b16 %v480, %v479
  %v541 = vpack.c.b16 %v482, %v481
  %v542 = vpack.c.b16 %v484, %v483
  %v543 = vpack.c.b16 %v486, %v485
  %v544 = vpack.c.b16 %v488, %v487
  %v545 = vpack.c.b16 %v490, %v489
  %v546 = vpack.c.b16 %v492, %v491
  %v547 = vpack.c.b16 %v494, %v493
  %v548 = vpack.c.b16 %v496, %v495
  %v549 = vpack.c.b16 %v498, %v497
  %v550 = vpack.c.b16 %v500, %v499
  %v551 = vpack.c.b16 %v502, %v501
  %v552 = vpack.c.b16 %v504, %v503
  %v553 = vpack.c.b16 %v506, %v505
  %v554 = vpack.c.b16 %v508, %v507
  %v555 = vpack.c.b16 %v510, %v509
  %v556 = vpack.c.b16 %v512, %v511
  %v557 = vpack.c.b16 %v514, %v513
  %v558 = vpack.c.b16 %v516, %v515
  %v559 = vpack.c.b16 %v518, %v517
  %v560 = vpack.c.b16 %v520, %v519
  %601 = vmatprep.subr.bf16.mxu0 0
  %602 = vmatpush1.bf16.msra.mxu0 %v528
  %603 = vmatprep.subr.bf16.mxu0 0
  %604 = vmatpush1.bf16.msra.mxu0 %v527
  %605 = vmatprep.subr.bf16.mxu0 0
  %606 = vmatpush1.bf16.msra.mxu0 %v526
  %607 = vmatprep.subr.bf16.mxu0 0
  %608 = vmatpush1.bf16.msra.mxu0 %v525
  %609 = vmatprep.subr.bf16.mxu0 0
  %610 = vmatpush1.bf16.msra.mxu0 %v524
  %611 = vmatprep.subr.bf16.mxu0 0
  %612 = vmatpush1.bf16.msra.mxu0 %v523
  %613 = vmatprep.subr.bf16.mxu0 0
  %614 = vmatpush1.bf16.msra.mxu0 %v522
  %615 = vmatprep.subr.bf16.mxu0 0
  %616 = vmatpush1.bf16.msra.mxu0 %v521
  %617 = vmatprep.subr.bf16.mxu0 0
  %618 = vmatpush2.bf16.msra.mxu0 %v536
  %619 = vmatprep.subr.bf16.mxu0 0
  %620 = vmatpush2.bf16.msra.mxu0 %v535
  %621 = vmatprep.subr.bf16.mxu0 0
  %622 = vmatpush2.bf16.msra.mxu0 %v534
  %623 = vmatprep.subr.bf16.mxu0 0
  %624 = vmatpush2.bf16.msra.mxu0 %v533
  %625 = vmatprep.subr.bf16.mxu0 0
  %626 = vmatpush2.bf16.msra.mxu0 %v532
  %627 = vmatprep.subr.bf16.mxu0 0
  %628 = vmatpush2.bf16.msra.mxu0 %v531
  %629 = vmatprep.subr.bf16.mxu0 0
  %630 = vmatpush2.bf16.msra.mxu0 %v530
  %631 = vmatprep.subr.bf16.mxu0 0
  %632 = vmatpush2.bf16.msra.mxu0 %v529
  %633 = vmatprep.mubr.bf16.mxu0 %v282
  %634 = vmatmul.mubr.bf16.gmra.mxu0 %v281
  %v635 = vpop.f32.mrf.mxu0
  %v636 = vadd.f32 %v151, %v635
  %v637 = vpop.f32.mrf.mxu0
  %v638 = vpop.f32.mrf.mxu0
  %v639 = vadd.f32 %v151, %v638
  %v640 = vpop.f32.mrf.mxu0
  %641 = vmatprep.mubr.bf16.mxu0 %v287
  %642 = vmatmul.mubr.bf16.gmra.mxu0 %v286
  %v643 = vpop.f32.mrf.mxu0
  %v644 = vadd.f32 %v151, %v643
  %v645 = vpop.f32.mrf.mxu0
  %v646 = vpop.f32.mrf.mxu0
  %v647 = vadd.f32 %v151, %v646
  %v648 = vpop.f32.mrf.mxu0
  %649 = vmatprep.mubr.bf16.mxu0 %v292
  %650 = vmatmul.mubr.bf16.gmra.mxu0 %v291
  %v651 = vpop.f32.mrf.mxu0
  %v652 = vadd.f32 %v151, %v651
  %v653 = vpop.f32.mrf.mxu0
  %v654 = vpop.f32.mrf.mxu0
  %v655 = vadd.f32 %v151, %v654
  %v656 = vpop.f32.mrf.mxu0
  %657 = vmatprep.mubr.bf16.mxu0 %v297
  %658 = vmatmul.mubr.bf16.gmra.mxu0 %v296
  %v659 = vpop.f32.mrf.mxu0
  %v660 = vadd.f32 %v151, %v659
  %v661 = vpop.f32.mrf.mxu0
  %v662 = vpop.f32.mrf.mxu0
  %v663 = vadd.f32 %v151, %v662
  %v664 = vpop.f32.mrf.mxu0
  %665 = vmatprep.mubr.bf16.mxu0 %v302
  %666 = vmatmul.mubr.bf16.gmra.mxu0 %v301
  %v667 = vpop.f32.mrf.mxu0
  %v668 = vadd.f32 %v151, %v667
  %v669 = vpop.f32.mrf.mxu0
  %v670 = vpop.f32.mrf.mxu0
  %v671 = vadd.f32 %v151, %v670
  %v672 = vpop.f32.mrf.mxu0
  %673 = vmatprep.mubr.bf16.mxu0 %v307
  %674 = vmatmul.mubr.bf16.gmra.mxu0 %v306
  %v675 = vpop.f32.mrf.mxu0
  %v676 = vadd.f32 %v151, %v675
  %v677 = vpop.f32.mrf.mxu0
  %v678 = vpop.f32.mrf.mxu0
  %v679 = vadd.f32 %v151, %v678
  %v680 = vpop.f32.mrf.mxu0
  %681 = vmatprep.mubr.bf16.mxu0 %v312
  %682 = vmatmul.mubr.bf16.gmra.mxu0 %v311
  %v683 = vpop.f32.mrf.mxu0
  %v684 = vadd.f32 %v151, %v683
  %v685 = vpop.f32.mrf.mxu0
  %v686 = vpop.f32.mrf.mxu0
  %v687 = vadd.f32 %v151, %v686
  %v688 = vpop.f32.mrf.mxu0
  %689 = vmatprep.mubr.bf16.mxu0 %v317
  %690 = vmatmul.mubr.bf16.gmra.mxu0 %v316
  %v691 = vpop.f32.mrf.mxu0
  %v692 = vadd.f32 %v151, %v691
  %v693 = vpop.f32.mrf.mxu0
  %v694 = vpop.f32.mrf.mxu0
  %v695 = vadd.f32 %v151, %v694
  %v696 = vpop.f32.mrf.mxu0
  %697 = vdwg.mxu0
  %698 = vmatprep.subr.bf16.mxu0 0
  %699 = vmatpush1.bf16.msra.mxu0 %v544
  %700 = vmatprep.subr.bf16.mxu0 0
  %701 = vmatpush1.bf16.msra.mxu0 %v543
  %702 = vmatprep.subr.bf16.mxu0 0
  %703 = vmatpush1.bf16.msra.mxu0 %v542
  %704 = vmatprep.subr.bf16.mxu0 0
  %705 = vmatpush1.bf16.msra.mxu0 %v541
  %706 = vmatprep.subr.bf16.mxu0 0
  %707 = vmatpush1.bf16.msra.mxu0 %v540
  %708 = vmatprep.subr.bf16.mxu0 0
  %709 = vmatpush1.bf16.msra.mxu0 %v539
  %710 = vmatprep.subr.bf16.mxu0 0
  %711 = vmatpush1.bf16.msra.mxu0 %v538
  %712 = vmatprep.subr.bf16.mxu0 0
  %713 = vmatpush1.bf16.msra.mxu0 %v537
  %714 = vmatprep.subr.bf16.mxu0 0
  %715 = vmatpush2.bf16.msra.mxu0 %v552
  %716 = vmatprep.subr.bf16.mxu0 0
  %717 = vmatpush2.bf16.msra.mxu0 %v551
  %718 = vmatprep.subr.bf16.mxu0 0
  %719 = vmatpush2.bf16.msra.mxu0 %v550
  %720 = vmatprep.subr.bf16.mxu0 0
  %721 = vmatpush2.bf16.msra.mxu0 %v549
  %722 = vmatprep.subr.bf16.mxu0 0
  %723 = vmatpush2.bf16.msra.mxu0 %v548
  %724 = vmatprep.subr.bf16.mxu0 0
  %725 = vmatpush2.bf16.msra.mxu0 %v547
  %726 = vmatprep.subr.bf16.mxu0 0
  %727 = vmatpush2.bf16.msra.mxu0 %v546
  %728 = vmatprep.subr.bf16.mxu0 0
  %729 = vmatpush2.bf16.msra.mxu0 %v545
  %730 = vmatprep.mubr.bf16.mxu0 %v284
  %731 = vmatmul.mubr.bf16.gmra.mxu0 %v283
  %v732 = vpop.f32.mrf.mxu0
  %v733 = vadd.f32 %v636, %v732
  %v734 = vpop.f32.mrf.mxu0
  %v735 = vpop.f32.mrf.mxu0
  %v736 = vadd.f32 %v639, %v735
  %v737 = vpop.f32.mrf.mxu0
  %738 = vmatprep.mubr.bf16.mxu0 %v289
  %739 = vmatmul.mubr.bf16.gmra.mxu0 %v288
  %v740 = vpop.f32.mrf.mxu0
  %v741 = vadd.f32 %v644, %v740
  %v742 = vpop.f32.mrf.mxu0
  %v743 = vpop.f32.mrf.mxu0
  %v744 = vadd.f32 %v647, %v743
  %v745 = vpop.f32.mrf.mxu0
  %746 = vmatprep.mubr.bf16.mxu0 %v294
  %747 = vmatmul.mubr.bf16.gmra.mxu0 %v293
  %v748 = vpop.f32.mrf.mxu0
  %v749 = vadd.f32 %v652, %v748
  %v750 = vpop.f32.mrf.mxu0
  %v751 = vpop.f32.mrf.mxu0
  %v752 = vadd.f32 %v655, %v751
  %v753 = vpop.f32.mrf.mxu0
  %754 = vmatprep.mubr.bf16.mxu0 %v299
  %755 = vmatmul.mubr.bf16.gmra.mxu0 %v298
  %v756 = vpop.f32.mrf.mxu0
  %v757 = vadd.f32 %v660, %v756
  %v758 = vpop.f32.mrf.mxu0
  %v759 = vpop.f32.mrf.mxu0
  %v760 = vadd.f32 %v663, %v759
  %v761 = vpop.f32.mrf.mxu0
  %762 = vmatprep.mubr.bf16.mxu0 %v304
  %763 = vmatmul.mubr.bf16.gmra.mxu0 %v303
  %v764 = vpop.f32.mrf.mxu0
  %v765 = vadd.f32 %v668, %v764
  %v766 = vpop.f32.mrf.mxu0
  %v767 = vpop.f32.mrf.mxu0
  %v768 = vadd.f32 %v671, %v767
  %v769 = vpop.f32.mrf.mxu0
  %770 = vmatprep.mubr.bf16.mxu0 %v309
  %771 = vmatmul.mubr.bf16.gmra.mxu0 %v308
  %v772 = vpop.f32.mrf.mxu0
  %v773 = vadd.f32 %v676, %v772
  %v774 = vpop.f32.mrf.mxu0
  %v775 = vpop.f32.mrf.mxu0
  %v776 = vadd.f32 %v679, %v775
  %v777 = vpop.f32.mrf.mxu0
  %778 = vmatprep.mubr.bf16.mxu0 %v314
  %779 = vmatmul.mubr.bf16.gmra.mxu0 %v313
  %v780 = vpop.f32.mrf.mxu0
  %v781 = vadd.f32 %v684, %v780
  %v782 = vpop.f32.mrf.mxu0
  %v783 = vpop.f32.mrf.mxu0
  %v784 = vadd.f32 %v687, %v783
  %v785 = vpop.f32.mrf.mxu0
  %786 = vmatprep.mubr.bf16.mxu0 %v319
  %787 = vmatmul.mubr.bf16.gmra.mxu0 %v318
  %v788 = vpop.f32.mrf.mxu0
  %v789 = vadd.f32 %v692, %v788
  %v790 = vpop.f32.mrf.mxu0
  %v791 = vpop.f32.mrf.mxu0
  %v792 = vadd.f32 %v695, %v791
  %v793 = vpop.f32.mrf.mxu0
  %794 = vdwg.mxu0
  %795 = vmatprep.subr.bf16.mxu0 0
  %796 = vmatpush1.bf16.msra.mxu0 %v560
  %797 = vmatprep.subr.bf16.mxu0 0
  %798 = vmatpush1.bf16.msra.mxu0 %v559
  %799 = vmatprep.subr.bf16.mxu0 0
  %800 = vmatpush1.bf16.msra.mxu0 %v558
  %801 = vmatprep.subr.bf16.mxu0 0
  %802 = vmatpush1.bf16.msra.mxu0 %v557
  %803 = vmatprep.subr.bf16.mxu0 0
  %804 = vmatpush1.bf16.msra.mxu0 %v556
  %805 = vmatprep.subr.bf16.mxu0 0
  %806 = vmatpush1.bf16.msra.mxu0 %v555
  %807 = vmatprep.subr.bf16.mxu0 0
  %808 = vmatpush1.bf16.msra.mxu0 %v554
  %809 = vmatprep.subr.bf16.mxu0 0
  %810 = vmatpush1.bf16.msra.mxu0 %v553
  %811 = vmatprep.subr.bf16.mxu0 0
  %812 = vmatpush2.bf16.msra.mxu0 0
  %813 = vmatprep.subr.bf16.mxu0 0
  %814 = vmatpush2.bf16.msra.mxu0 0
  %815 = vmatprep.subr.bf16.mxu0 0
  %816 = vmatpush2.bf16.msra.mxu0 0
  %817 = vmatprep.subr.bf16.mxu0 0
  %818 = vmatpush2.bf16.msra.mxu0 0
  %819 = vmatprep.subr.bf16.mxu0 0
  %820 = vmatpush2.bf16.msra.mxu0 0
  %821 = vmatprep.subr.bf16.mxu0 0
  %822 = vmatpush2.bf16.msra.mxu0 0
  %823 = vmatprep.subr.bf16.mxu0 0
  %824 = vmatpush2.bf16.msra.mxu0 0
  %825 = vmatprep.subr.bf16.mxu0 0
  %826 = vmatpush2.bf16.msra.mxu0 0
  %827 = vmatprep.mubr.bf16.mxu0 0
  %828 = vmatmul.mubr.bf16.gmra.mxu0 %v285
  %v829 = vpop.f32.mrf.mxu0
  %v830 = vadd.f32 %v733, %v829
  %v831 = vpop.f32.mrf.mxu0
  %v832 = vpop.f32.mrf.mxu0
  %v833 = vadd.f32 %v736, %v832
  %v834 = vpop.f32.mrf.mxu0
  %835 = vmatprep.mubr.bf16.mxu0 0
  %836 = vmatmul.mubr.bf16.gmra.mxu0 %v290
  %v837 = vpop.f32.mrf.mxu0
  %v838 = vadd.f32 %v741, %v837
  %v839 = vpop.f32.mrf.mxu0
  %v840 = vpop.f32.mrf.mxu0
  %v841 = vadd.f32 %v744, %v840
  %v842 = vpop.f32.mrf.mxu0
  %843 = vmatprep.mubr.bf16.mxu0 0
  %844 = vmatmul.mubr.bf16.gmra.mxu0 %v295
  %v845 = vpop.f32.mrf.mxu0
  %v846 = vadd.f32 %v749, %v845
  %v847 = vpop.f32.mrf.mxu0
  %v848 = vpop.f32.mrf.mxu0
  %v849 = vadd.f32 %v752, %v848
  %v850 = vpop.f32.mrf.mxu0
  %851 = vmatprep.mubr.bf16.mxu0 0
  %852 = vmatmul.mubr.bf16.gmra.mxu0 %v300
  %v853 = vpop.f32.mrf.mxu0
  %v854 = vadd.f32 %v757, %v853
  %v855 = vpop.f32.mrf.mxu0
  %v856 = vpop.f32.mrf.mxu0
  %v857 = vadd.f32 %v760, %v856
  %v858 = vpop.f32.mrf.mxu0
  %859 = vmatprep.mubr.bf16.mxu0 0
  %860 = vmatmul.mubr.bf16.gmra.mxu0 %v305
  %v861 = vpop.f32.mrf.mxu0
  %v862 = vadd.f32 %v765, %v861
  %v863 = vpop.f32.mrf.mxu0
  %v864 = vpop.f32.mrf.mxu0
  %v865 = vadd.f32 %v768, %v864
  %v866 = vpop.f32.mrf.mxu0
  %867 = vmatprep.mubr.bf16.mxu0 0
  %868 = vmatmul.mubr.bf16.gmra.mxu0 %v310
  %v869 = vpop.f32.mrf.mxu0
  %v870 = vadd.f32 %v773, %v869
  %v871 = vpop.f32.mrf.mxu0
  %v872 = vpop.f32.mrf.mxu0
  %v873 = vadd.f32 %v776, %v872
  %v874 = vpop.f32.mrf.mxu0
  %875 = vmatprep.mubr.bf16.mxu0 0
  %876 = vmatmul.mubr.bf16.gmra.mxu0 %v315
  %v877 = vpop.f32.mrf.mxu0
  %v878 = vadd.f32 %v781, %v877
  %v879 = vpop.f32.mrf.mxu0
  %v880 = vpop.f32.mrf.mxu0
  %v881 = vadd.f32 %v784, %v880
  %v882 = vpop.f32.mrf.mxu0
  %883 = vmatprep.mubr.bf16.mxu0 0
  %884 = vmatmul.mubr.bf16.gmra.mxu0 %v320
  %v885 = vpop.f32.mrf.mxu0
  %v886 = vadd.f32 %v789, %v885
  %v887 = vpop.f32.mrf.mxu0
  %v888 = vpop.f32.mrf.mxu0
  %v889 = vadd.f32 %v792, %v888
  %v890 = vpop.f32.mrf.mxu0
  %891 = vdwg.mxu0
  %v892 = vld [vmem:[%s3] sm:$0xf]
  %v893 = vld [vmem:[%s3 + $0x4] sm:$0xf]
  %v894 = vld [vmem:[%s3 + $0x8] sm:$0xf]
  %v895 = vld [vmem:[%s3 + $0xc] sm:$0xf]
  %v896 = vld [vmem:[%s3 + $0x10] sm:$0xf]
  %v897 = vld [vmem:[%s3 + $0x14] sm:$0xf]
  %v898 = vld [vmem:[%s3 + $0x18] sm:$0xf]
  %v899 = vld [vmem:[%s3 + $0x1c] sm:$0xf]
  %v900 = vld [vmem:[%s3 + $0x20] sm:$0xf]
  %v901 = vld [vmem:[%s3 + $0x24] sm:$0xf]
  %v902 = vld [vmem:[%s3 + $0x28] sm:$0xf]
  %v903 = vld [vmem:[%s3 + $0x2c] sm:$0xf]
  %v904 = vld [vmem:[%s3 + $0x30] sm:$0xf]
  %v905 = vld [vmem:[%s3 + $0x34] sm:$0xf]
  %v906 = vld [vmem:[%s3 + $0x38] sm:$0xf]
  %v907 = vld [vmem:[%s3 + $0x3c] sm:$0xf]
  %v908 = vunpack.c.l.bf16 %v892
  %v909 = vunpack.c.l.bf16 %v893
  %v910 = vunpack.c.l.bf16 %v894
  %v911 = vunpack.c.l.bf16 %v895
  %v912 = vunpack.c.l.bf16 %v896
  %v913 = vunpack.c.l.bf16 %v897
  %v914 = vunpack.c.l.bf16 %v898
  %v915 = vunpack.c.l.bf16 %v899
  %v916 = vunpack.c.l.bf16 %v900
  %v917 = vunpack.c.l.bf16 %v901
  %v918 = vunpack.c.l.bf16 %v902
  %v919 = vunpack.c.l.bf16 %v903
  %v920 = vunpack.c.l.bf16 %v904
  %v921 = vunpack.c.l.bf16 %v905
  %v922 = vunpack.c.l.bf16 %v906
  %v923 = vunpack.c.l.bf16 %v907
  %v924 = vadd.f32 %v830, %v908
  %v925 = vadd.f32 %v833, %v909
  %v926 = vadd.f32 %v838, %v910
  %v927 = vadd.f32 %v841, %v911
  %v928 = vadd.f32 %v846, %v912
  %v929 = vadd.f32 %v849, %v913
  %v930 = vadd.f32 %v854, %v914
  %v931 = vadd.f32 %v857, %v915
  %v932 = vadd.f32 %v862, %v916
  %v933 = vadd.f32 %v865, %v917
  %v934 = vadd.f32 %v870, %v918
  %v935 = vadd.f32 %v873, %v919
  %v936 = vadd.f32 %v878, %v920
  %v937 = vadd.f32 %v881, %v921
  %v938 = vadd.f32 %v886, %v922
  %v939 = vadd.f32 %v889, %v923
  %v940 = vmax.f32 %v924, 0.0
  %v941 = vmax.f32 %v925, 0.0
  %v942 = vmax.f32 %v926, 0.0
  %v943 = vmax.f32 %v927, 0.0
  %v944 = vmax.f32 %v928, 0.0
  %v945 = vmax.f32 %v929, 0.0
  %v946 = vmax.f32 %v930, 0.0
  %v947 = vmax.f32 %v931, 0.0
  %v948 = vmax.f32 %v932, 0.0
  %v949 = vmax.f32 %v933, 0.0
  %v950 = vmax.f32 %v934, 0.0
  %v951 = vmax.f32 %v935, 0.0
  %v952 = vmax.f32 %v936, 0.0
  %v953 = vmax.f32 %v937, 0.0
  %v954 = vmax.f32 %v938, 0.0
  %v955 = vmax.f32 %v939, 0.0
  %v956 = vpack.c.bf16 %v941, %v940
  %v957 = vpack.c.bf16 %v943, %v942
  %v958 = vpack.c.bf16 %v945, %v944
  %v959 = vpack.c.bf16 %v947, %v946
  %v960 = vpack.c.bf16 %v949, %v948
  %v961 = vpack.c.bf16 %v951, %v950
  %v962 = vpack.c.bf16 %v953, %v952
  %v963 = vpack.c.bf16 %v955, %v954
  %v972 = vunpack.c.l.b16 %v956
  %v973 = vunpack.c.h.b16 %v956
  %v974 = vunpack.c.l.b16 %v957
  %v975 = vunpack.c.h.b16 %v957
  %v976 = vunpack.c.l.b16 %v958
  %v977 = vunpack.c.h.b16 %v958
  %v978 = vunpack.c.l.b16 %v959
  %v979 = vunpack.c.h.b16 %v959
  %v980 = vunpack.c.l.b16 %v960
  %v981 = vunpack.c.h.b16 %v960
  %v982 = vunpack.c.l.b16 %v961
  %v983 = vunpack.c.h.b16 %v961
  %v984 = vunpack.c.l.b16 %v962
  %v985 = vunpack.c.h.b16 %v962
  %v986 = vunpack.c.l.b16 %v963
  %v987 = vunpack.c.h.b16 %v963
  %v988 = vpack.c.b16 %v972, %v972
  %v989 = vpack.c.b16 %v973, %v973
  %v990 = vpack.c.b16 %v974, %v974
  %v991 = vpack.c.b16 %v975, %v975
  %v992 = vpack.c.b16 %v976, %v976
  %v993 = vpack.c.b16 %v977, %v977
  %v994 = vpack.c.b16 %v978, %v978
  %v995 = vpack.c.b16 %v979, %v979
  %v996 = vpack.c.b16 %v980, %v980
  %v997 = vpack.c.b16 %v981, %v981
  %v998 = vpack.c.b16 %v982, %v982
  %v999 = vpack.c.b16 %v983, %v983
  %v1000 = vpack.c.b16 %v984, %v984
  %v1001 = vpack.c.b16 %v985, %v985
  %v1002 = vpack.c.b16 %v986, %v986
  %v1003 = vpack.c.b16 %v987, %v987
  %1020 = vst [vmem:[%s4] sm:$0xf] %v988
  %1021 = vst [vmem:[%s4 + $0x4] sm:$0xf] %v989
  %1022 = vst [vmem:[%s4 + $0x8] sm:$0xf] %v990
  %1023 = vst [vmem:[%s4 + $0xc] sm:$0xf] %v991
  %1024 = vst [vmem:[%s4 + $0x10] sm:$0xf] %v992
  %1025 = vst [vmem:[%s4 + $0x14] sm:$0xf] %v993
  %1026 = vst [vmem:[%s4 + $0x18] sm:$0xf] %v994
  %1027 = vst [vmem:[%s4 + $0x1c] sm:$0xf] %v995
  %1028 = vst [vmem:[%s4 + $0x20] sm:$0xf] %v996
  %1029 = vst [vmem:[%s4 + $0x24] sm:$0xf] %v997
  %1030 = vst [vmem:[%s4 + $0x28] sm:$0xf] %v998
  %1031 = vst [vmem:[%s4 + $0x2c] sm:$0xf] %v999
  %1032 = vst [vmem:[%s4 + $0x30] sm:$0xf] %v1000
  %1033 = vst [vmem:[%s4 + $0x34] sm:$0xf] %v1001
  %1034 = vst [vmem:[%s4 + $0x38] sm:$0xf] %v1002
  %1035 = vst [vmem:[%s4 + $0x3c] sm:$0xf] %v1003
  // Predicated region
  $region18: #{resnet_encoder_forward.7} parent=0 // pred_check
    _
  $region19: #{resnet_encoder_forward.7} parent=0 // pred_check_branch
    %1037 = sbr.rel (0) target = $region21
  $region20: #{resnet_encoder_forward.7} parent=0 // pred_region
    _
  $region21: #{resnet_encoder_forward.7} parent=0 // pred_fallthru
    _
  // Predicated region
  $region22: #{resnet_encoder_forward.7} parent=0 // pred_check
    _
  $region23: #{resnet_encoder_forward.7} parent=0 // pred_check_branch
    %1039 = sbr.rel (0) target = $region25
  $region24: #{resnet_encoder_forward.7} parent=0 // pred_region
    _
  $region25: #{resnet_encoder_forward.7} parent=0 // pred_fallthru
    _

</llo_original>
